<compile_context>
chip_gen: v6e
topology: v6e:2x2x1
jax: 0.10.0
libtpu: 0.0.40
codegen_flags: <defaults>
</compile_context>

<pallas_src>
import functools

import jax
import jax.numpy as jnp
from jax.experimental import pallas as pl
from jax.experimental.pallas import tpu as pltpu

_VMEM_LIMIT = 32 << 20   # <= v7x physical VMEM (64 MiB); plenty for this kernel.
_ROWS_TARGET = 1024      # ~points processed per grid step (M of the matmuls).


def _round_up(x, m):
    return ((x + m - 1) // m) * m


def _conv_pool_kernel(x_ref, w1_ref, b1_ref, w2_ref, b2_ref, w3_ref, b3_ref,
                      w4_ref, b4_ref, pooled_ref, *, bt, tn):
    # x_ref block: (bt, tn, 2) f32 -- bt batch elements x tn points.
    j = pl.program_id(1)

    x = x_ref[...].reshape(bt * tn, 2)          # (rows, 2) f32
    w1 = w1_ref[...]                            # (2, 64) f32

    # conv1 (2 -> 64): K=2 contraction as two VPU FMAs (outer-product form);
    # an MXU dot with K=2 would use ~2/128 of the MXU depth.
    h = x[:, 0:1] * w1[0:1, :] + x[:, 1:2] * w1[1:2, :] + b1_ref[...]
    h = jnp.maximum(h, 0.0).astype(jnp.bfloat16)

    # conv2 (64 -> 128) + ReLU
    h = jnp.dot(h, w2_ref[...], preferred_element_type=jnp.float32) + b2_ref[...]
    h = jnp.maximum(h, 0.0).astype(jnp.bfloat16)

    # conv3 (128 -> 256) + ReLU
    h = jnp.dot(h, w3_ref[...], preferred_element_type=jnp.float32) + b3_ref[...]
    h = jnp.maximum(h, 0.0).astype(jnp.bfloat16)

    # conv4 (256 -> 1024); the per-channel bias commutes with max-pooling,
    # so it is added to the pooled block below instead of (rows, 1024).
    h = jnp.dot(h, w4_ref[...], preferred_element_type=jnp.float32)

    # MaxPool1d over this tile's point axis (XLU sublane reduce), plus bias.
    blk = jnp.max(h.reshape(bt, tn, 1024), axis=1) + b4_ref[...]   # (bt, 1024)

    # Running max across point tiles, accumulated in the resident output block.
    @pl.when(j == 0)
    def _():
        pooled_ref[...] = blk

    @pl.when(j > 0)
    def _():
        pooled_ref[...] = jnp.maximum(pooled_ref[...], blk)


def _fc1_kernel(p_ref, w_ref, b_ref, out_ref):
    # fc1 (1024 -> 1024) + ReLU (dropout d5 is identity at inference).
    p = p_ref[...].astype(jnp.bfloat16)
    y = jnp.dot(p, w_ref[...], preferred_element_type=jnp.float32) + b_ref[...]
    out_ref[...] = jnp.maximum(y, 0.0)


def _full_spec(arr):
    return pl.BlockSpec(arr.shape, lambda *args: (0,) * arr.ndim)


def shape_detector_forward(x_ncw, params):
    """x_ncw: (B, 2, N) float32 (PyTorch NCW layout). Returns (B, 1024) latent."""
    B, c_in, N = x_ncw.shape
    assert c_in == 2
    (w1, b1, w2, b2, w3, b3, w4, b4, wfc1, bfc1) = params

    # ---- tiling: bt batch elements x tn points per grid step ---------------
    bt = B if B <= 8 else 8                     # output tiles need bt%8==0 or bt==B
    b_pad = _round_up(B, bt)
    tn = max(8, min(_round_up(N, 8), ((_ROWS_TARGET // bt) // 8) * 8))
    n_pad = _round_up(N, tn)
    n_blocks = n_pad // tn

    # ---- glue: NCW -> (b_pad, n_pad, 2). Edge-replicated padding means every
    # padded point reproduces a real point's conv4 output, so the max-pool
    # never needs an in-kernel validity mask.
    x = jnp.transpose(x_ncw, (0, 2, 1)).astype(jnp.float32)      # (B, N, 2)
    x = jnp.pad(x, ((0, b_pad - B), (0, n_pad - N), (0, 0)), mode="edge")

    # ---- weights: pre-transposed; big matmul weights in bf16 ---------------
    w1t = w1.astype(jnp.float32).T                               # (2, 64)
    w2t = w2.T.astype(jnp.bfloat16)                              # (64, 128)
    w3t = w3.T.astype(jnp.bfloat16)                              # (128, 256)
    w4t = w4.T.astype(jnp.bfloat16)                              # (256, 1024)
    wfc1t = wfc1.T.astype(jnp.bfloat16)                          # (1024, 1024)
    b1r = b1.astype(jnp.float32)[None, :]
    b2r = b2.astype(jnp.float32)[None, :]
    b3r = b3.astype(jnp.float32)[None, :]
    b4r = b4.astype(jnp.float32)[None, :]
    bfc1r = bfc1.astype(jnp.float32)[None, :]

    # ---- kernel 1: conv stack + running max-pool over point tiles ----------
    conv_kernel = functools.partial(_conv_pool_kernel, bt=bt, tn=tn)
    pooled = pl.pallas_call(
        conv_kernel,
        out_shape=jax.ShapeDtypeStruct((b_pad, 1024), jnp.float32),
        grid_spec=pltpu.PrefetchScalarGridSpec(
            num_scalar_prefetch=0,
            grid=(b_pad // bt, n_blocks),
            in_specs=[
                pl.BlockSpec((bt, tn, 2), lambda i, j: (i, j, 0)),
                _full_spec(w1t), _full_spec(b1r),
                _full_spec(w2t), _full_spec(b2r),
                _full_spec(w3t), _full_spec(b3r),
                _full_spec(w4t), _full_spec(b4r),
            ],
            out_specs=pl.BlockSpec((bt, 1024), lambda i, j: (i, 0)),
        ),
        compiler_params=pltpu.CompilerParams(
            dimension_semantics=("parallel", "arbitrary"),
            vmem_limit_bytes=_VMEM_LIMIT,
        ),
    )(x, w1t, b1r, w2t, b2r, w3t, b3r, w4t, b4r)
    pooled = pooled[:B]                                          # (B, 1024)

    # ---- kernel 2: fc1 on the pooled features (M = full batch) -------------
    if B <= 256:
        tm, b_pad2 = B, B
    else:
        tm = 256
        b_pad2 = _round_up(B, tm)
        pooled = jnp.pad(pooled, ((0, b_pad2 - B), (0, 0)))
    latent = pl.pallas_call(
        _fc1_kernel,
        out_shape=jax.ShapeDtypeStruct((b_pad2, 1024), jnp.float32),
        grid_spec=pltpu.PrefetchScalarGridSpec(
            num_scalar_prefetch=0,
            grid=(b_pad2 // tm,),
            in_specs=[
                pl.BlockSpec((tm, 1024), lambda i: (i, 0)),
                _full_spec(wfc1t), _full_spec(bfc1r),
            ],
            out_specs=pl.BlockSpec((tm, 1024), lambda i: (i, 0)),
        ),
        compiler_params=pltpu.CompilerParams(
            dimension_semantics=("parallel",),
            vmem_limit_bytes=_VMEM_LIMIT,
        ),
    )(pooled, wfc1t, bfc1r)
    return latent[:B]


def init_params(key):
    """Deterministic init matching shapes of conv1..conv4 and fc1."""
    ks = jax.random.split(key, 10)

    def lin(kw, kb, out_f, in_f):
        bound = 1.0 / jnp.sqrt(in_f)
        w = jax.random.uniform(kw, (out_f, in_f), jnp.float32, -bound, bound)
        b = jax.random.uniform(kb, (out_f,), jnp.float32, -bound, bound)
        return w, b

    w1, b1 = lin(ks[0], ks[1], 64, 2)           # conv1 weight (64, 2, 1) squeezed
    w2, b2 = lin(ks[2], ks[3], 128, 64)         # conv2
    w3, b3 = lin(ks[4], ks[5], 256, 128)        # conv3
    w4, b4 = lin(ks[6], ks[7], 1024, 256)       # conv4
    wfc1, bfc1 = lin(ks[8], ks[9], 1024, 1024)  # fc1
    return (w1, b1, w2, b2, w3, b3, w4, b4, wfc1, bfc1)


def reference_forward(x_ncw, params):
    """Pure-JAX f32 reference of the PyTorch forward (dropout = identity)."""
    (w1, b1, w2, b2, w3, b3, w4, b4, wfc1, bfc1) = params
    x = jnp.transpose(x_ncw, (0, 2, 1))            # (B, N, 2)
    h = jax.nn.relu(x @ w1.T + b1)
    h = jax.nn.relu(h @ w2.T + b2)
    h = jax.nn.relu(h @ w3.T + b3)
    h = h @ w4.T + b4                              # (B, N, 1024)
    pooled = jnp.max(h, axis=1)                    # MaxPool1d over N -> (B, 1024)
    return jax.nn.relu(pooled @ wfc1.T + bfc1)     # fc1 + ReLU


# TODO(synk): classify()/reg() heads (fc3_*, fcta*, fcre*, fctr*) are not part
# of forward(); they could be added as additional small matmul kernels.

if __name__ == "__main__":
    key = jax.random.PRNGKey(0)
    k_par, k_x = jax.random.split(key)
    params = init_params(k_par)

    B, N = 2, 16
    x = jax.random.normal(k_x, (B, 2, N), dtype=jnp.float32)  # NCW like PyTorch

    out = shape_detector_forward(x, params)
    out = jax.block_until_ready(out)

    ref = reference_forward(x, params)
    assert out.shape == (B, 1024)
    # bf16 weights/activations with f32 accumulation: loosened tolerance.
    assert jnp.allclose(out, ref, atol=5e-2, rtol=5e-2)
    print("KERNEL_OK")
</pallas_src>

<mosaic_0001>
module attributes {stable_mosaic.version = 11 : i64} {
  func.func @_conv_pool_kernel(%arg0: i32, %arg1: i32, %arg2: memref<2x16x2xf32, #tpu.memory_space<vmem>>, %arg3: memref<2x64xf32, #tpu.memory_space<vmem>>, %arg4: memref<1x64xf32, #tpu.memory_space<vmem>>, %arg5: memref<64x128xbf16, #tpu.memory_space<vmem>>, %arg6: memref<1x128xf32, #tpu.memory_space<vmem>>, %arg7: memref<128x256xbf16, #tpu.memory_space<vmem>>, %arg8: memref<1x256xf32, #tpu.memory_space<vmem>>, %arg9: memref<256x1024xbf16, #tpu.memory_space<vmem>>, %arg10: memref<1x1024xf32, #tpu.memory_space<vmem>>, %arg11: memref<2x1024xf32, #tpu.memory_space<vmem>>) attributes {dimension_semantics = [#tpu.dimension_semantics<parallel>, #tpu.dimension_semantics<arbitrary>], iteration_bounds = array<i64: 1, 1>, scalar_prefetch = 0 : i64, scratch_operands = 0 : i64, tpu.core_type = #tpu.core_type<tc>, window_params = [{transform_indices = @transform_0, window_bounds = array<i64: 2, 16, 2>}, {pipeline_mode = #tpu.pipeline_mode<synchronous>, transform_indices = @transform_1, window_bounds = array<i64: 2, 64>}, {pipeline_mode = #tpu.pipeline_mode<synchronous>, transform_indices = @transform_2, window_bounds = array<i64: 1, 64>}, {pipeline_mode = #tpu.pipeline_mode<synchronous>, transform_indices = @transform_3, window_bounds = array<i64: 64, 128>}, {pipeline_mode = #tpu.pipeline_mode<synchronous>, transform_indices = @transform_4, window_bounds = array<i64: 1, 128>}, {pipeline_mode = #tpu.pipeline_mode<synchronous>, transform_indices = @transform_5, window_bounds = array<i64: 128, 256>}, {pipeline_mode = #tpu.pipeline_mode<synchronous>, transform_indices = @transform_6, window_bounds = array<i64: 1, 256>}, {pipeline_mode = #tpu.pipeline_mode<synchronous>, transform_indices = @transform_7, window_bounds = array<i64: 256, 1024>}, {pipeline_mode = #tpu.pipeline_mode<synchronous>, transform_indices = @transform_8, window_bounds = array<i64: 1, 1024>}, {transform_indices = @transform_9, window_bounds = array<i64: 2, 1024>}]} {
    %c0 = arith.constant 0 : index
    %c0_0 = arith.constant 0 : index
    %c0_1 = arith.constant 0 : index
    %0 = vector.load %arg2[%c0, %c0_0, %c0_1] : memref<2x16x2xf32, #tpu.memory_space<vmem>>, vector<2x16x2xf32>
    %1 = vector.shape_cast %0 : vector<2x16x2xf32> to vector<32x2xf32>
    %c0_2 = arith.constant 0 : index
    %c0_3 = arith.constant 0 : index
    %2 = vector.load %arg3[%c0_2, %c0_3] : memref<2x64xf32, #tpu.memory_space<vmem>>, vector<2x64xf32>
    %3 = vector.extract_strided_slice %1 {offsets = [0, 0], sizes = [32, 1], strides = [1, 1]} : vector<32x2xf32> to vector<32x1xf32>
    %4 = vector.extract_strided_slice %2 {offsets = [0, 0], sizes = [1, 64], strides = [1, 1]} : vector<2x64xf32> to vector<1x64xf32>
    %5 = vector.broadcast %3 : vector<32x1xf32> to vector<32x64xf32>
    %6 = vector.broadcast %4 : vector<1x64xf32> to vector<32x64xf32>
    %7 = arith.mulf %5, %6 : vector<32x64xf32>
    %8 = vector.extract_strided_slice %1 {offsets = [0, 1], sizes = [32, 1], strides = [1, 1]} : vector<32x2xf32> to vector<32x1xf32>
    %9 = vector.extract_strided_slice %2 {offsets = [1, 0], sizes = [1, 64], strides = [1, 1]} : vector<2x64xf32> to vector<1x64xf32>
    %10 = vector.broadcast %8 : vector<32x1xf32> to vector<32x64xf32>
    %11 = vector.broadcast %9 : vector<1x64xf32> to vector<32x64xf32>
    %12 = arith.mulf %10, %11 : vector<32x64xf32>
    %13 = arith.addf %7, %12 : vector<32x64xf32>
    %c0_4 = arith.constant 0 : index
    %c0_5 = arith.constant 0 : index
    %14 = vector.load %arg4[%c0_4, %c0_5] : memref<1x64xf32, #tpu.memory_space<vmem>>, vector<1x64xf32>
    %15 = vector.broadcast %14 : vector<1x64xf32> to vector<32x64xf32>
    %16 = arith.addf %13, %15 : vector<32x64xf32>
    %cst = arith.constant 0.000000e+00 : f32
    %17 = vector.broadcast %cst : f32 to vector<32x64xf32>
    %18 = arith.maximumf %16, %17 : vector<32x64xf32>
    %19 = arith.truncf %18 : vector<32x64xf32> to vector<32x64xbf16>
    %c0_6 = arith.constant 0 : index
    %c0_7 = arith.constant 0 : index
    %20 = vector.load %arg5[%c0_6, %c0_7] : memref<64x128xbf16, #tpu.memory_space<vmem>>, vector<64x128xbf16>
    %cst_8 = arith.constant dense<0.000000e+00> : vector<32x128xf32>
    %21 = tpu.matmul %19, %20, %cst_8 {dimension_numbers = #tpu.dot_dimension_numbers<[1], [0], [0], [1], [0, 0, 1, 1], [], []>} : vector<32x64xbf16>, vector<64x128xbf16>, vector<32x128xf32> -> vector<32x128xf32>
    %c0_9 = arith.constant 0 : index
    %c0_10 = arith.constant 0 : index
    %22 = vector.load %arg6[%c0_9, %c0_10] : memref<1x128xf32, #tpu.memory_space<vmem>>, vector<1x128xf32>
    %23 = vector.broadcast %22 : vector<1x128xf32> to vector<32x128xf32>
    %24 = arith.addf %21, %23 : vector<32x128xf32>
    %cst_11 = arith.constant 0.000000e+00 : f32
    %25 = vector.broadcast %cst_11 : f32 to vector<32x128xf32>
    %26 = arith.maximumf %24, %25 : vector<32x128xf32>
    %27 = arith.truncf %26 : vector<32x128xf32> to vector<32x128xbf16>
    %c0_12 = arith.constant 0 : index
    %c0_13 = arith.constant 0 : index
    %28 = vector.load %arg7[%c0_12, %c0_13] : memref<128x256xbf16, #tpu.memory_space<vmem>>, vector<128x256xbf16>
    %cst_14 = arith.constant dense<0.000000e+00> : vector<32x256xf32>
    %29 = tpu.matmul %27, %28, %cst_14 {dimension_numbers = #tpu.dot_dimension_numbers<[1], [0], [0], [1], [0, 0, 1, 1], [], []>} : vector<32x128xbf16>, vector<128x256xbf16>, vector<32x256xf32> -> vector<32x256xf32>
    %c0_15 = arith.constant 0 : index
    %c0_16 = arith.constant 0 : index
    %30 = vector.load %arg8[%c0_15, %c0_16] : memref<1x256xf32, #tpu.memory_space<vmem>>, vector<1x256xf32>
    %31 = vector.broadcast %30 : vector<1x256xf32> to vector<32x256xf32>
    %32 = arith.addf %29, %31 : vector<32x256xf32>
    %cst_17 = arith.constant 0.000000e+00 : f32
    %33 = vector.broadcast %cst_17 : f32 to vector<32x256xf32>
    %34 = arith.maximumf %32, %33 : vector<32x256xf32>
    %35 = arith.truncf %34 : vector<32x256xf32> to vector<32x256xbf16>
    %c0_18 = arith.constant 0 : index
    %c0_19 = arith.constant 0 : index
    %36 = vector.load %arg9[%c0_18, %c0_19] : memref<256x1024xbf16, #tpu.memory_space<vmem>>, vector<256x1024xbf16>
    %cst_20 = arith.constant dense<0.000000e+00> : vector<32x1024xf32>
    %37 = tpu.matmul %35, %36, %cst_20 {dimension_numbers = #tpu.dot_dimension_numbers<[1], [0], [0], [1], [0, 0, 1, 1], [], []>} : vector<32x256xbf16>, vector<256x1024xbf16>, vector<32x1024xf32> -> vector<32x1024xf32>
    %38 = vector.shape_cast %37 : vector<32x1024xf32> to vector<2x16x1024xf32>
    %cst_21 = arith.constant dense<0xFF800000> : vector<2x1024xf32>
    %39 = vector.multi_reduction <maximumf>, %38, %cst_21 [1] : vector<2x16x1024xf32> to vector<2x1024xf32>
    %c0_22 = arith.constant 0 : index
    %c0_23 = arith.constant 0 : index
    %40 = vector.load %arg10[%c0_22, %c0_23] : memref<1x1024xf32, #tpu.memory_space<vmem>>, vector<1x1024xf32>
    %41 = vector.broadcast %40 : vector<1x1024xf32> to vector<2x1024xf32>
    %42 = arith.addf %39, %41 : vector<2x1024xf32>
    %c0_i32 = arith.constant 0 : i32
    %43 = arith.cmpi eq, %arg1, %c0_i32 : i32
    %44 = arith.extui %43 : i1 to i32
    %c0_i32_24 = arith.constant 0 : i32
    %45 = arith.cmpi ne, %44, %c0_i32_24 : i32
    scf.if %45 {
      %c0_27 = arith.constant 0 : index
      %c0_28 = arith.constant 0 : index
      %49 = vector.load %arg11[%c0_27, %c0_28] : memref<2x1024xf32, #tpu.memory_space<vmem>>, vector<2x1024xf32>
      tpu.vector_store %arg11[%c0_27, %c0_28], %42 {strides = array<i32>} : memref<2x1024xf32, #tpu.memory_space<vmem>>, vector<2x1024xf32>,
    } else {
    }
    %c0_i32_25 = arith.constant 0 : i32
    %46 = arith.cmpi sgt, %arg1, %c0_i32_25 : i32
    %47 = arith.extui %46 : i1 to i32
    %c0_i32_26 = arith.constant 0 : i32
    %48 = arith.cmpi ne, %47, %c0_i32_26 : i32
    scf.if %48 {
      %c0_27 = arith.constant 0 : index
      %c0_28 = arith.constant 0 : index
      %49 = vector.load %arg11[%c0_27, %c0_28] : memref<2x1024xf32, #tpu.memory_space<vmem>>, vector<2x1024xf32>
      %50 = arith.maximumf %49, %42 : vector<2x1024xf32>
      %c0_29 = arith.constant 0 : index
      %c0_30 = arith.constant 0 : index
      %51 = vector.load %arg11[%c0_29, %c0_30] : memref<2x1024xf32, #tpu.memory_space<vmem>>, vector<2x1024xf32>
      tpu.vector_store %arg11[%c0_29, %c0_30], %50 {strides = array<i32>} : memref<2x1024xf32, #tpu.memory_space<vmem>>, vector<2x1024xf32>,
    } else {
    }
    return
  }
  func.func @transform_0(%arg0: i32, %arg1: i32) -> (i32, i32, i32) {
    %c0_i32 = arith.constant 0 : i32
    %c0_i32_0 = arith.constant 0 : i32
    return %arg0, %arg1, %c0_i32 : i32, i32, i32
  }
  func.func @transform_1(%arg0: i32, %arg1: i32) -> (i32, i32) {
    %c0_i32 = arith.constant 0 : i32
    %c0_i32_0 = arith.constant 0 : i32
    %c0_i32_1 = arith.constant 0 : i32
    return %c0_i32, %c0_i32_0 : i32, i32
  }
  func.func @transform_2(%arg0: i32, %arg1: i32) -> (i32, i32) {
    %c0_i32 = arith.constant 0 : i32
    %c0_i32_0 = arith.constant 0 : i32
    %c0_i32_1 = arith.constant 0 : i32
    return %c0_i32, %c0_i32_0 : i32, i32
  }
  func.func @transform_3(%arg0: i32, %arg1: i32) -> (i32, i32) {
    %c0_i32 = arith.constant 0 : i32
    %c0_i32_0 = arith.constant 0 : i32
    %c0_i32_1 = arith.constant 0 : i32
    return %c0_i32, %c0_i32_0 : i32, i32
  }
  func.func @transform_4(%arg0: i32, %arg1: i32) -> (i32, i32) {
    %c0_i32 = arith.constant 0 : i32
    %c0_i32_0 = arith.constant 0 : i32
    %c0_i32_1 = arith.constant 0 : i32
    return %c0_i32, %c0_i32_0 : i32, i32
  }
  func.func @transform_5(%arg0: i32, %arg1: i32) -> (i32, i32) {
    %c0_i32 = arith.constant 0 : i32
    %c0_i32_0 = arith.constant 0 : i32
    %c0_i32_1 = arith.constant 0 : i32
    return %c0_i32, %c0_i32_0 : i32, i32
  }
  func.func @transform_6(%arg0: i32, %arg1: i32) -> (i32, i32) {
    %c0_i32 = arith.constant 0 : i32
    %c0_i32_0 = arith.constant 0 : i32
    %c0_i32_1 = arith.constant 0 : i32
    return %c0_i32, %c0_i32_0 : i32, i32
  }
  func.func @transform_7(%arg0: i32, %arg1: i32) -> (i32, i32) {
    %c0_i32 = arith.constant 0 : i32
    %c0_i32_0 = arith.constant 0 : i32
    %c0_i32_1 = arith.constant 0 : i32
    return %c0_i32, %c0_i32_0 : i32, i32
  }
  func.func @transform_8(%arg0: i32, %arg1: i32) -> (i32, i32) {
    %c0_i32 = arith.constant 0 : i32
    %c0_i32_0 = arith.constant 0 : i32
    %c0_i32_1 = arith.constant 0 : i32
    return %c0_i32, %c0_i32_0 : i32, i32
  }
  func.func @transform_9(%arg0: i32, %arg1: i32) -> (i32, i32) {
    %c0_i32 = arith.constant 0 : i32
    %c0_i32_0 = arith.constant 0 : i32
    return %arg0, %c0_i32 : i32, i32
  }
}

</mosaic_0001>

<llo_original>
// kernel: tpu_custom_call.1
$region0: #{tpu_custom_call.1}
  #allocation0 [shape = 'u32[]', space=smem, size = 0x4, offset = 0x4, fixed_abs, tag = 'smem constant byte address 0x4 - core index']
  #allocation1 [shape = 'u32[144,128]{1,0:T(1,128)}', space=vmem, size = 0x12000, scoped, tag = 'internal scratch']
  %s0 = inlined_call_operand.vmem [shape: f32[2,16,2], index: 0, kind: input, shape index: {}]
  %s1 = inlined_call_operand.hbm [shape: f32[2,64], index: 1, kind: input, shape index: {}]
  %s2 = inlined_call_operand.vmem [shape: f32[1,64], index: 2, kind: input, shape index: {}]
  %s3 = inlined_call_operand.vmem [shape: bf16[64,128], index: 3, kind: input, shape index: {}]
  %s4 = inlined_call_operand.hbm [shape: f32[1,128], index: 4, kind: input, shape index: {}]
  %s5 = inlined_call_operand.hbm [shape: bf16[128,256], index: 5, kind: input, shape index: {}]
  %s6 = inlined_call_operand.vmem [shape: f32[1,256], index: 6, kind: input, shape index: {}]
  %s7 = inlined_call_operand.hbm [shape: bf16[256,1024], index: 7, kind: input, shape index: {}]
  %s8 = inlined_call_operand.vmem [shape: f32[1,1024], index: 8, kind: input, shape index: {}]
  %s9 = inlined_call_operand.hbm [shape: f32[2,1024], index: 9, kind: output, shape index: {}]
  %s10 = sld [smem:[#allocation0]]
  $region70: #{tpu_custom_call.1} parent=0
    _
  %s12 = ssub.s32 1, %s10
  %s13 = scalar_select 0, %s12, %s10
  $region1: #{tpu_custom_call.1} parent=0
    #allocation2 [shape = 'u8[1024]{0}', space=vmem, size = 0x400, scoped, tag = 'input window, operand 1, single buffered']
    #allocation3 [shape = 's32[1]{0}', space=sflag, size = 0x4, scoped, tag = 'scoped memory for tpu_custom_call.1']
    #allocation4 [shape = 's32[1]{0}', space=sflag, size = 0x4, scoped, tag = 'scoped memory for tpu_custom_call.1']
    #allocation5 [shape = 'u8[512]{0}', space=vmem, size = 0x400, scoped, tag = 'input window, operand 4, single buffered']
    #allocation6 [shape = 's32[1]{0}', space=sflag, size = 0x4, scoped, tag = 'scoped memory for tpu_custom_call.1']
    #allocation7 [shape = 'u8[65536]{0}', space=vmem, size = 0x10000, scoped, tag = 'input window, operand 5, single buffered']
    #allocation8 [shape = 'u8[524288]{0}', space=vmem, size = 0x80000, scoped, tag = 'input window, operand 7, single buffered']
    #allocation9 [shape = 's32[1]{0}', space=sflag, size = 0x4, scoped, tag = 'scoped memory for tpu_custom_call.1']
    #allocation10 [shape = 'u8[8192]{0}', space=vmem, size = 0x2000, scoped, tag = 'output window, operand 0, single buffered']
    %14 = vsyncpa [#allocation3], 0
    %15 = vsyncpa [#allocation6], 0
    %16 = vsyncpa [#allocation9], 0
    %17 = vsyncpa [#allocation4], 0
    // Predicated region
    $region2: #{tpu_custom_call.1} parent=1 // pred_check
      _
    $region3: #{tpu_custom_call.1} parent=1 // pred_check_branch
      %19 = sbr.rel (0) target = $region5
    $region4: #{tpu_custom_call.1} parent=1 // pred_region
      _
    $region5: #{tpu_custom_call.1} parent=1 // pred_fallthru
      _
    // Predicated region
    $region6: #{tpu_custom_call.1} parent=1 // pred_check
      _
    $region7: #{tpu_custom_call.1} parent=1 // pred_check_branch
      %21 = sbr.rel (0) target = $region9
    $region8: #{tpu_custom_call.1} parent=1 // pred_region
      %s23 = ssub.s32 32, 32
      %24 = vsyncadd [#allocation3], %s23
      %s26 = sshll.u32 [#allocation2], 4
      %s27 = int_to_ptr.vmem [resolvable:$true] %s26
      %29 = dma.hbm_to_vmem [thread:$0]  %s1, 32, %s27, [#allocation3]
    $region9: #{tpu_custom_call.1} parent=1 // pred_fallthru
      _
    // Predicated region
    $region10: #{tpu_custom_call.1} parent=1 // pred_check
      _
    $region11: #{tpu_custom_call.1} parent=1 // pred_check_branch
      %31 = sbr.rel (0) target = $region13
    $region12: #{tpu_custom_call.1} parent=1 // pred_region
      _
    $region13: #{tpu_custom_call.1} parent=1 // pred_fallthru
      _
    // Predicated region
    $region14: #{tpu_custom_call.1} parent=1 // pred_check
      _
    $region15: #{tpu_custom_call.1} parent=1 // pred_check_branch
      %33 = sbr.rel (0) target = $region17
    $region16: #{tpu_custom_call.1} parent=1 // pred_region
      _
    $region17: #{tpu_custom_call.1} parent=1 // pred_fallthru
      _
    // Predicated region
    $region18: #{tpu_custom_call.1} parent=1 // pred_check
      _
    $region19: #{tpu_custom_call.1} parent=1 // pred_check_branch
      %35 = sbr.rel (0) target = $region21
    $region20: #{tpu_custom_call.1} parent=1 // pred_region
      %s37 = ssub.s32 16, 16
      %38 = vsyncadd [#allocation6], %s37
      %s40 = sshll.u32 [#allocation5], 4
      %s41 = int_to_ptr.vmem [resolvable:$true] %s40
      %43 = dma.hbm_to_vmem [thread:$0]  %s4, 16, %s41, [#allocation6]
    $region21: #{tpu_custom_call.1} parent=1 // pred_fallthru
      _
    // Predicated region
    $region22: #{tpu_custom_call.1} parent=1 // pred_check
      _
    $region23: #{tpu_custom_call.1} parent=1 // pred_check_branch
      %45 = sbr.rel (0) target = $region25
    $region24: #{tpu_custom_call.1} parent=1 // pred_region
      %s47 = ssub.s32 2048, 2048
      %48 = vsyncadd [#allocation6], %s47
      %s49 = sshll.u32 [#allocation7], 4
      %s50 = int_to_ptr.vmem [resolvable:$true] %s49
      %55 = dma.hbm_to_vmem [thread:$0]  %s5, 2048, %s50, [#allocation6], 128, 128, 8
    $region25: #{tpu_custom_call.1} parent=1 // pred_fallthru
      _
    // Predicated region
    $region26: #{tpu_custom_call.1} parent=1 // pred_check
      _
    $region27: #{tpu_custom_call.1} parent=1 // pred_check_branch
      %57 = sbr.rel (0) target = $region29
    $region28: #{tpu_custom_call.1} parent=1 // pred_region
      _
    $region29: #{tpu_custom_call.1} parent=1 // pred_fallthru
      _
    // Predicated region
    $region30: #{tpu_custom_call.1} parent=1 // pred_check
      _
    $region31: #{tpu_custom_call.1} parent=1 // pred_check_branch
      %59 = sbr.rel (0) target = $region33
    $region32: #{tpu_custom_call.1} parent=1 // pred_region
      %s61 = ssub.s32 16384, 16384
      %62 = vsyncadd [#allocation9], %s61
      %s63 = sshll.u32 [#allocation8], 4
      %s64 = int_to_ptr.vmem [resolvable:$true] %s63
      %69 = dma.hbm_to_vmem [thread:$0]  %s7, 16384, %s64, [#allocation9], 512, 512, 32
    $region33: #{tpu_custom_call.1} parent=1 // pred_fallthru
      _
    // Predicated region
    $region34: #{tpu_custom_call.1} parent=1 // pred_check
      _
    $region35: #{tpu_custom_call.1} parent=1 // pred_check_branch
      %71 = sbr.rel (0) target = $region37
    $region36: #{tpu_custom_call.1} parent=1 // pred_region
      _
    $region37: #{tpu_custom_call.1} parent=1 // pred_fallthru
      _
    // Predicated region
    $region38: #{tpu_custom_call.1} parent=1 // pred_check
      _
    $region39: #{tpu_custom_call.1} parent=1 // pred_check_branch
      %73 = sbr.rel (0) target = $region41
    $region40: #{tpu_custom_call.1} parent=1 // pred_region
      %74 = dma.done [#allocation3], 32
    $region41: #{tpu_custom_call.1} parent=1 // pred_fallthru
      _
    // Predicated region
    $region42: #{tpu_custom_call.1} parent=1 // pred_check
      _
    $region43: #{tpu_custom_call.1} parent=1 // pred_check_branch
      %76 = sbr.rel (0) target = $region45
    $region44: #{tpu_custom_call.1} parent=1 // pred_region
      %77 = dma.done [#allocation6], 16
    $region45: #{tpu_custom_call.1} parent=1 // pred_fallthru
      _
    // Predicated region
    $region46: #{tpu_custom_call.1} parent=1 // pred_check
      _
    $region47: #{tpu_custom_call.1} parent=1 // pred_check_branch
      %79 = sbr.rel (0) target = $region49
    $region48: #{tpu_custom_call.1} parent=1 // pred_region
      %80 = dma.done [#allocation6], 2048
    $region49: #{tpu_custom_call.1} parent=1 // pred_fallthru
      _
    // Predicated region
    $region50: #{tpu_custom_call.1} parent=1 // pred_check
      _
    $region51: #{tpu_custom_call.1} parent=1 // pred_check_branch
      %82 = sbr.rel (0) target = $region53
    $region52: #{tpu_custom_call.1} parent=1 // pred_region
      %83 = dma.done [#allocation9], 16384
    $region53: #{tpu_custom_call.1} parent=1 // pred_fallthru
      _
    %v85 = vld [vmem:[%s0] sm:$0xff]
    %v86 = vld [vmem:[%s0 + $0x8] sm:$0xff]
    %v87 = vld [vmem:[%s0 + $0x10] sm:$0xff]
    %v88 = vld [vmem:[%s0 + $0x18] sm:$0xff]
    %v89 = vld [vmem:[#allocation2] sm:$0x3]
    %91 = vset.pattern.permute.xlu0 0
    %92 = vperm.xlu0 %91, %v85
    %v93 = vpop.permute.xlu0 %92
    %96 = vset.pattern.permute.xlu0 0
    %97 = vperm.xlu0 %96, %v86
    %v98 = vpop.permute.xlu0 %97
    %101 = vset.pattern.permute.xlu0 0
    %102 = vperm.xlu0 %101, %v87
    %v103 = vpop.permute.xlu0 %102
    %106 = vset.pattern.permute.xlu0 0
    %107 = vperm.xlu0 %106, %v88
    %v108 = vpop.permute.xlu0 %107
    %v110 = vlaneseq
    %v111 = vshrl.u32 %v110, 7
    %v112 = vsub.s32 0, %v111
    %v113 = vrot.slane %v89, %v112
    %v114 = vmul.f32 %v93, %v113
    %v115 = vmul.f32 %v98, %v113
    %v116 = vmul.f32 %v103, %v113
    %v117 = vmul.f32 %v108, %v113
    %118 = vset.pattern.permute.xlu0 1
    %119 = vperm.xlu0 %118, %v85
    %v120 = vpop.permute.xlu0 %119
    %122 = vset.pattern.permute.xlu0 1
    %123 = vperm.xlu0 %122, %v86
    %v124 = vpop.permute.xlu0 %123
    %126 = vset.pattern.permute.xlu0 1
    %127 = vperm.xlu0 %126, %v87
    %v128 = vpop.permute.xlu0 %127
    %130 = vset.pattern.permute.xlu0 1
    %131 = vperm.xlu0 %130, %v88
    %v132 = vpop.permute.xlu0 %131
    %v134 = vlaneseq
    %v135 = vshrl.u32 %v134, 7
    %v136 = vsub.s32 1, %v135
    %v137 = vrot.slane %v89, %v136
    %v138 = vmul.f32 %v120, %v137
    %v139 = vmul.f32 %v124, %v137
    %v140 = vmul.f32 %v128, %v137
    %v141 = vmul.f32 %v132, %v137
    %v142 = vadd.f32 %v114, %v138
    %v143 = vadd.f32 %v115, %v139
    %v144 = vadd.f32 %v116, %v140
    %v145 = vadd.f32 %v117, %v141
    %v146 = vld [vmem:[%s2] sm:$0x1]
    %v148 = vlaneseq
    %v149 = vshrl.u32 %v148, 7
    %v150 = vsub.s32 0, %v149
    %v151 = vrot.slane %v146, %v150
    %v153 = vadd.f32 %v142, %v151
    %v154 = vadd.f32 %v143, %v151
    %v155 = vadd.f32 %v144, %v151
    %v156 = vadd.f32 %v145, %v151
    %v157 = vmax.f32 %v153, 0.0
    %v158 = vmax.f32 %v154, 0.0
    %v159 = vmax.f32 %v155, 0.0
    %v160 = vmax.f32 %v156, 0.0
    %v161 = vpack.c.bf16 %v158, %v157
    %v162 = vpack.c.bf16 %v160, %v159
    %v163 = vld [vmem:[%s3] sm:$0xf]
    %v164 = vld [vmem:[%s3 + $0x4] sm:$0xf]
    %v165 = vld [vmem:[%s3 + $0x8] sm:$0xf]
    %v166 = vld [vmem:[%s3 + $0xc] sm:$0xf]
    %v167 = vld [vmem:[%s3 + $0x10] sm:$0xf]
    %v168 = vld [vmem:[%s3 + $0x14] sm:$0xf]
    %v169 = vld [vmem:[%s3 + $0x18] sm:$0xf]
    %v170 = vld [vmem:[%s3 + $0x1c] sm:$0xf]
    %v171 = vld [vmem:[#allocation5] sm:$0x1]
    %v173 = vlaneseq
    %v174 = vshrl.u32 %v173, 7
    %v175 = vsub.s32 0, %v174
    %v176 = vrot.slane %v171, %v175
    %v186 = vunpack.c.l.b16 %v163
    %v187 = vunpack.c.l.b16 %v164
    %v188 = vunpack.c.l.b16 %v165
    %v189 = vunpack.c.l.b16 %v166
    %v190 = vunpack.c.l.b16 %v167
    %v191 = vunpack.c.l.b16 %v168
    %v192 = vunpack.c.l.b16 %v169
    %v193 = vunpack.c.l.b16 %v170
    %v194 = vpack.c.b16 %v187, %v186
    %v195 = vpack.c.b16 %v189, %v188
    %v196 = vpack.c.b16 %v191, %v190
    %v197 = vpack.c.b16 %v193, %v192
    %vm202 = vcmask 523264
    %v204 = vsel %vm202, %v161, 0
    %v207 = vsel %vm202, %v162, 0
    %209 = vmatprep.subr.bf16.mxu0 0
    %210 = vmatpush1.bf16.msra.mxu0 0
    %211 = vmatprep.subr.bf16.mxu0 0
    %212 = vmatpush1.bf16.msra.mxu0 0
    %213 = vmatprep.subr.bf16.mxu0 0
    %214 = vmatpush1.bf16.msra.mxu0 0
    %215 = vmatprep.subr.bf16.mxu0 0
    %216 = vmatpush1.bf16.msra.mxu0 0
    %217 = vmatprep.subr.bf16.mxu0 0
    %218 = vmatpush1.bf16.msra.mxu0 %v197
    %219 = vmatprep.subr.bf16.mxu0 0
    %220 = vmatpush1.bf16.msra.mxu0 %v196
    %221 = vmatprep.subr.bf16.mxu0 0
    %222 = vmatpush1.bf16.msra.mxu0 %v195
    %223 = vmatprep.subr.bf16.mxu0 0
    %224 = vmatpush1.bf16.msra.mxu0 %v194
    %225 = vmatprep.subr.bf16.mxu0 0
    %226 = vmatpush2.bf16.msra.mxu0 0
    %227 = vmatprep.subr.bf16.mxu0 0
    %228 = vmatpush2.bf16.msra.mxu0 0
    %229 = vmatprep.subr.bf16.mxu0 0
    %230 = vmatpush2.bf16.msra.mxu0 0
    %231 = vmatprep.subr.bf16.mxu0 0
    %232 = vmatpush2.bf16.msra.mxu0 0
    %233 = vmatprep.subr.bf16.mxu0 0
    %234 = vmatpush2.bf16.msra.mxu0 0
    %235 = vmatprep.subr.bf16.mxu0 0
    %236 = vmatpush2.bf16.msra.mxu0 0
    %237 = vmatprep.subr.bf16.mxu0 0
    %238 = vmatpush2.bf16.msra.mxu0 0
    %239 = vmatprep.subr.bf16.mxu0 0
    %240 = vmatpush2.bf16.msra.mxu0 0
    %241 = vmatprep.mubr.bf16.mxu0 0
    %242 = vmatmul.mubr.bf16.gmra.mxu0 %v204
    %v243 = vpop.f32.mrf.mxu0
    %v244 = vadd.f32 %v176, %v243
    %v245 = vpop.f32.mrf.mxu0
    %v246 = vpop.f32.mrf.mxu0
    %v247 = vadd.f32 %v176, %v246
    %v248 = vpop.f32.mrf.mxu0
    %249 = vmatprep.mubr.bf16.mxu0 0
    %250 = vmatmul.mubr.bf16.gmra.mxu0 %v207
    %v251 = vpop.f32.mrf.mxu0
    %v252 = vadd.f32 %v176, %v251
    %v253 = vpop.f32.mrf.mxu0
    %v254 = vpop.f32.mrf.mxu0
    %v255 = vadd.f32 %v176, %v254
    %v256 = vpop.f32.mrf.mxu0
    %257 = vdwg.mxu0
    %v258 = vmax.f32 %v244, 0.0
    %v259 = vmax.f32 %v247, 0.0
    %v260 = vmax.f32 %v252, 0.0
    %v261 = vmax.f32 %v255, 0.0
    %v262 = vpack.c.bf16 %v259, %v258
    %v263 = vpack.c.bf16 %v261, %v260
    %v264 = vld [vmem:[#allocation7] sm:$0xff]
    %v265 = vld [vmem:[#allocation7 + $0x8] sm:$0xff]
    %v266 = vld [vmem:[#allocation7 + $0x10] sm:$0xff]
    %v267 = vld [vmem:[#allocation7 + $0x18] sm:$0xff]
    %v268 = vld [vmem:[#allocation7 + $0x20] sm:$0xff]
    %v269 = vld [vmem:[#allocation7 + $0x28] sm:$0xff]
    %v270 = vld [vmem:[#allocation7 + $0x30] sm:$0xff]
    %v271 = vld [vmem:[#allocation7 + $0x38] sm:$0xff]
    %v272 = vld [vmem:[#allocation7 + $0x40] sm:$0xff]
    %v273 = vld [vmem:[#allocation7 + $0x48] sm:$0xff]
    %v274 = vld [vmem:[#allocation7 + $0x50] sm:$0xff]
    %v275 = vld [vmem:[#allocation7 + $0x58] sm:$0xff]
    %v276 = vld [vmem:[#allocation7 + $0x60] sm:$0xff]
    %v277 = vld [vmem:[#allocation7 + $0x68] sm:$0xff]
    %v278 = vld [vmem:[#allocation7 + $0x70] sm:$0xff]
    %v279 = vld [vmem:[#allocation7 + $0x78] sm:$0xff]
    %v280 = vld [vmem:[%s6] sm:$0x3]
    %v282 = vlaneseq
    %v283 = vshrl.u32 %v282, 7
    %v284 = vsub.s32 0, %v283
    %v285 = vrot.slane %v280, %v284
    %v286 = vlaneseq
    %v287 = vshrl.u32 %v286, 7
    %v288 = vsub.s32 1, %v287
    %v289 = vrot.slane %v280, %v288
    %v308 = vunpack.c.l.b16 %v264
    %v309 = vunpack.c.h.b16 %v264
    %v310 = vunpack.c.l.b16 %v265
    %v311 = vunpack.c.h.b16 %v265
    %v312 = vunpack.c.l.b16 %v266
    %v313 = vunpack.c.h.b16 %v266
    %v314 = vunpack.c.l.b16 %v267
    %v315 = vunpack.c.h.b16 %v267
    %v316 = vunpack.c.l.b16 %v268
    %v317 = vunpack.c.h.b16 %v268
    %v318 = vunpack.c.l.b16 %v269
    %v319 = vunpack.c.h.b16 %v269
    %v320 = vunpack.c.l.b16 %v270
    %v321 = vunpack.c.h.b16 %v270
    %v322 = vunpack.c.l.b16 %v271
    %v323 = vunpack.c.h.b16 %v271
    %v324 = vunpack.c.l.b16 %v272
    %v325 = vunpack.c.h.b16 %v272
    %v326 = vunpack.c.l.b16 %v273
    %v327 = vunpack.c.h.b16 %v273
    %v328 = vunpack.c.l.b16 %v274
    %v329 = vunpack.c.h.b16 %v274
    %v330 = vunpack.c.l.b16 %v275
    %v331 = vunpack.c.h.b16 %v275
    %v332 = vunpack.c.l.b16 %v276
    %v333 = vunpack.c.h.b16 %v276
    %v334 = vunpack.c.l.b16 %v277
    %v335 = vunpack.c.h.b16 %v277
    %v336 = vunpack.c.l.b16 %v278
    %v337 = vunpack.c.h.b16 %v278
    %v338 = vunpack.c.l.b16 %v279
    %v339 = vunpack.c.h.b16 %v279
    %v340 = vpack.c.b16 %v310, %v308
    %v341 = vpack.c.b16 %v311, %v309
    %v342 = vpack.c.b16 %v314, %v312
    %v343 = vpack.c.b16 %v315, %v313
    %v344 = vpack.c.b16 %v318, %v316
    %v345 = vpack.c.b16 %v319, %v317
    %v346 = vpack.c.b16 %v322, %v320
    %v347 = vpack.c.b16 %v323, %v321
    %v348 = vpack.c.b16 %v326, %v324
    %v349 = vpack.c.b16 %v327, %v325
    %v350 = vpack.c.b16 %v330, %v328
    %v351 = vpack.c.b16 %v331, %v329
    %v352 = vpack.c.b16 %v334, %v332
    %v353 = vpack.c.b16 %v335, %v333
    %v354 = vpack.c.b16 %v338, %v336
    %v355 = vpack.c.b16 %v339, %v337
    %372 = vmatprep.subr.bf16.mxu0 %v355
    %373 = vmatpush1.bf16.msra.mxu0 %v354
    %374 = vmatprep.subr.bf16.mxu0 %v353
    %375 = vmatpush1.bf16.msra.mxu0 %v352
    %376 = vmatprep.subr.bf16.mxu0 %v351
    %377 = vmatpush1.bf16.msra.mxu0 %v350
    %378 = vmatprep.subr.bf16.mxu0 %v349
    %379 = vmatpush1.bf16.msra.mxu0 %v348
    %380 = vmatprep.subr.bf16.mxu0 %v347
    %381 = vmatpush1.bf16.msra.mxu0 %v346
    %382 = vmatprep.subr.bf16.mxu0 %v345
    %383 = vmatpush1.bf16.msra.mxu0 %v344
    %384 = vmatprep.subr.bf16.mxu0 %v343
    %385 = vmatpush1.bf16.msra.mxu0 %v342
    %386 = vmatprep.subr.bf16.mxu0 %v341
    %387 = vmatpush1.bf16.msra.mxu0 %v340
    %388 = vmatprep.subr.bf16.mxu0 0
    %389 = vmatpush2.bf16.msra.mxu0 0
    %390 = vmatprep.subr.bf16.mxu0 0
    %391 = vmatpush2.bf16.msra.mxu0 0
    %392 = vmatprep.subr.bf16.mxu0 0
    %393 = vmatpush2.bf16.msra.mxu0 0
    %394 = vmatprep.subr.bf16.mxu0 0
    %395 = vmatpush2.bf16.msra.mxu0 0
    %396 = vmatprep.subr.bf16.mxu0 0
    %397 = vmatpush2.bf16.msra.mxu0 0
    %398 = vmatprep.subr.bf16.mxu0 0
    %399 = vmatpush2.bf16.msra.mxu0 0
    %400 = vmatprep.subr.bf16.mxu0 0
    %401 = vmatpush2.bf16.msra.mxu0 0
    %402 = vmatprep.subr.bf16.mxu0 0
    %403 = vmatpush2.bf16.msra.mxu0 0
    %404 = vmatprep.mubr.bf16.mxu0 0
    %405 = vmatmul.mubr.bf16.gmra.mxu0 %v262
    %v406 = vpop.f32.mrf.mxu0
    %v407 = vadd.f32 %v285, %v406
    %v408 = vpop.f32.mrf.mxu0
    %v409 = vadd.f32 %v289, %v408
    %v410 = vpop.f32.mrf.mxu0
    %v411 = vadd.f32 %v285, %v410
    %v412 = vpop.f32.mrf.mxu0
    %v413 = vadd.f32 %v289, %v412
    %414 = vmatprep.mubr.bf16.mxu0 0
    %415 = vmatmul.mubr.bf16.gmra.mxu0 %v263
    %v416 = vpop.f32.mrf.mxu0
    %v417 = vadd.f32 %v285, %v416
    %v418 = vpop.f32.mrf.mxu0
    %v419 = vadd.f32 %v289, %v418
    %v420 = vpop.f32.mrf.mxu0
    %v421 = vadd.f32 %v285, %v420
    %v422 = vpop.f32.mrf.mxu0
    %v423 = vadd.f32 %v289, %v422
    %424 = vdwg.mxu0
    %v425 = vmax.f32 %v407, 0.0
    %v426 = vmax.f32 %v409, 0.0
    %v427 = vmax.f32 %v411, 0.0
    %v428 = vmax.f32 %v413, 0.0
    %v429 = vmax.f32 %v417, 0.0
    %v430 = vmax.f32 %v419, 0.0
    %v431 = vmax.f32 %v421, 0.0
    %v432 = vmax.f32 %v423, 0.0
    %v433 = vpack.c.bf16 %v427, %v425
    %v434 = vpack.c.bf16 %v428, %v426
    %v435 = vpack.c.bf16 %v431, %v429
    %v436 = vpack.c.bf16 %v432, %v430
    %v437 = vld [vmem:[#allocation8] sm:$0xff]
    %v438 = vld [vmem:[#allocation8 + $0x8] sm:$0xff]
    %v439 = vld [vmem:[#allocation8 + $0x10] sm:$0xff]
    %v440 = vld [vmem:[#allocation8 + $0x18] sm:$0xff]
    %v441 = vld [vmem:[#allocation8 + $0x20] sm:$0xff]
    %v442 = vld [vmem:[#allocation8 + $0x28] sm:$0xff]
    %v443 = vld [vmem:[#allocation8 + $0x30] sm:$0xff]
    %v444 = vld [vmem:[#allocation8 + $0x38] sm:$0xff]
    %v445 = vld [vmem:[#allocation8 + $0x40] sm:$0xff]
    %v446 = vld [vmem:[#allocation8 + $0x48] sm:$0xff]
    %v447 = vld [vmem:[#allocation8 + $0x50] sm:$0xff]
    %v448 = vld [vmem:[#allocation8 + $0x58] sm:$0xff]
    %v449 = vld [vmem:[#allocation8 + $0x60] sm:$0xff]
    %v450 = vld [vmem:[#allocation8 + $0x68] sm:$0xff]
    %v451 = vld [vmem:[#allocation8 + $0x70] sm:$0xff]
    %v452 = vld [vmem:[#allocation8 + $0x78] sm:$0xff]
    %v453 = vld [vmem:[#allocation8 + $0x80] sm:$0xff]
    %v454 = vld [vmem:[#allocation8 + $0x88] sm:$0xff]
    %v455 = vld [vmem:[#allocation8 + $0x90] sm:$0xff]
    %v456 = vld [vmem:[#allocation8 + $0x98] sm:$0xff]
    %v457 = vld [vmem:[#allocation8 + $0xa0] sm:$0xff]
    %v458 = vld [vmem:[#allocation8 + $0xa8] sm:$0xff]
    %v459 = vld [vmem:[#allocation8 + $0xb0] sm:$0xff]
    %v460 = vld [vmem:[#allocation8 + $0xb8] sm:$0xff]
    %v461 = vld [vmem:[#allocation8 + $0xc0] sm:$0xff]
    %v462 = vld [vmem:[#allocation8 + $0xc8] sm:$0xff]
    %v463 = vld [vmem:[#allocation8 + $0xd0] sm:$0xff]
    %v464 = vld [vmem:[#allocation8 + $0xd8] sm:$0xff]
    %v465 = vld [vmem:[#allocation8 + $0xe0] sm:$0xff]
    %v466 = vld [vmem:[#allocation8 + $0xe8] sm:$0xff]
    %v467 = vld [vmem:[#allocation8 + $0xf0] sm:$0xff]
    %v468 = vld [vmem:[#allocation8 + $0xf8] sm:$0xff]
    %v469 = vld [vmem:[#allocation8 + $0x100] sm:$0xff]
    %v470 = vld [vmem:[#allocation8 + $0x108] sm:$0xff]
    %v471 = vld [vmem:[#allocation8 + $0x110] sm:$0xff]
    %v472 = vld [vmem:[#allocation8 + $0x118] sm:$0xff]
    %v473 = vld [vmem:[#allocation8 + $0x120] sm:$0xff]
    %v474 = vld [vmem:[#allocation8 + $0x128] sm:$0xff]
    %v475 = vld [vmem:[#allocation8 + $0x130] sm:$0xff]
    %v476 = vld [vmem:[#allocation8 + $0x138] sm:$0xff]
    %v477 = vld [vmem:[#allocation8 + $0x140] sm:$0xff]
    %v478 = vld [vmem:[#allocation8 + $0x148] sm:$0xff]
    %v479 = vld [vmem:[#allocation8 + $0x150] sm:$0xff]
    %v480 = vld [vmem:[#allocation8 + $0x158] sm:$0xff]
    %v481 = vld [vmem:[#allocation8 + $0x160] sm:$0xff]
    %v482 = vld [vmem:[#allocation8 + $0x168] sm:$0xff]
    %v483 = vld [vmem:[#allocation8 + $0x170] sm:$0xff]
    %v484 = vld [vmem:[#allocation8 + $0x178] sm:$0xff]
    %v485 = vld [vmem:[#allocation8 + $0x180] sm:$0xff]
    %v486 = vld [vmem:[#allocation8 + $0x188] sm:$0xff]
    %v487 = vld [vmem:[#allocation8 + $0x190] sm:$0xff]
    %v488 = vld [vmem:[#allocation8 + $0x198] sm:$0xff]
    %v489 = vld [vmem:[#allocation8 + $0x1a0] sm:$0xff]
    %v490 = vld [vmem:[#allocation8 + $0x1a8] sm:$0xff]
    %v491 = vld [vmem:[#allocation8 + $0x1b0] sm:$0xff]
    %v492 = vld [vmem:[#allocation8 + $0x1b8] sm:$0xff]
    %v493 = vld [vmem:[#allocation8 + $0x1c0] sm:$0xff]
    %v494 = vld [vmem:[#allocation8 + $0x1c8] sm:$0xff]
    %v495 = vld [vmem:[#allocation8 + $0x1d0] sm:$0xff]
    %v496 = vld [vmem:[#allocation8 + $0x1d8] sm:$0xff]
    %v497 = vld [vmem:[#allocation8 + $0x1e0] sm:$0xff]
    %v498 = vld [vmem:[#allocation8 + $0x1e8] sm:$0xff]
    %v499 = vld [vmem:[#allocation8 + $0x1f0] sm:$0xff]
    %v500 = vld [vmem:[#allocation8 + $0x1f8] sm:$0xff]
    %v501 = vld [vmem:[#allocation8 + $0x200] sm:$0xff]
    %v502 = vld [vmem:[#allocation8 + $0x208] sm:$0xff]
    %v503 = vld [vmem:[#allocation8 + $0x210] sm:$0xff]
    %v504 = vld [vmem:[#allocation8 + $0x218] sm:$0xff]
    %v505 = vld [vmem:[#allocation8 + $0x220] sm:$0xff]
    %v506 = vld [vmem:[#allocation8 + $0x228] sm:$0xff]
    %v507 = vld [vmem:[#allocation8 + $0x230] sm:$0xff]
    %v508 = vld [vmem:[#allocation8 + $0x238] sm:$0xff]
    %v509 = vld [vmem:[#allocation8 + $0x240] sm:$0xff]
    %v510 = vld [vmem:[#allocation8 + $0x248] sm:$0xff]
    %v511 = vld [vmem:[#allocation8 + $0x250] sm:$0xff]
    %v512 = vld [vmem:[#allocation8 + $0x258] sm:$0xff]
    %v513 = vld [vmem:[#allocation8 + $0x260] sm:$0xff]
    %v514 = vld [vmem:[#allocation8 + $0x268] sm:$0xff]
    %v515 = vld [vmem:[#allocation8 + $0x270] sm:$0xff]
    %v516 = vld [vmem:[#allocation8 + $0x278] sm:$0xff]
    %v517 = vld [vmem:[#allocation8 + $0x280] sm:$0xff]
    %v518 = vld [vmem:[#allocation8 + $0x288] sm:$0xff]
    %v519 = vld [vmem:[#allocation8 + $0x290] sm:$0xff]
    %v520 = vld [vmem:[#allocation8 + $0x298] sm:$0xff]
    %v521 = vld [vmem:[#allocation8 + $0x2a0] sm:$0xff]
    %v522 = vld [vmem:[#allocation8 + $0x2a8] sm:$0xff]
    %v523 = vld [vmem:[#allocation8 + $0x2b0] sm:$0xff]
    %v524 = vld [vmem:[#allocation8 + $0x2b8] sm:$0xff]
    %v525 = vld [vmem:[#allocation8 + $0x2c0] sm:$0xff]
    %v526 = vld [vmem:[#allocation8 + $0x2c8] sm:$0xff]
    %v527 = vld [vmem:[#allocation8 + $0x2d0] sm:$0xff]
    %v528 = vld [vmem:[#allocation8 + $0x2d8] sm:$0xff]
    %v529 = vld [vmem:[#allocation8 + $0x2e0] sm:$0xff]
    %v530 = vld [vmem:[#allocation8 + $0x2e8] sm:$0xff]
    %v531 = vld [vmem:[#allocation8 + $0x2f0] sm:$0xff]
    %v532 = vld [vmem:[#allocation8 + $0x2f8] sm:$0xff]
    %v533 = vld [vmem:[#allocation8 + $0x300] sm:$0xff]
    %v534 = vld [vmem:[#allocation8 + $0x308] sm:$0xff]
    %v535 = vld [vmem:[#allocation8 + $0x310] sm:$0xff]
    %v536 = vld [vmem:[#allocation8 + $0x318] sm:$0xff]
    %v537 = vld [vmem:[#allocation8 + $0x320] sm:$0xff]
    %v538 = vld [vmem:[#allocation8 + $0x328] sm:$0xff]
    %v539 = vld [vmem:[#allocation8 + $0x330] sm:$0xff]
    %v540 = vld [vmem:[#allocation8 + $0x338] sm:$0xff]
    %v541 = vld [vmem:[#allocation8 + $0x340] sm:$0xff]
    %v542 = vld [vmem:[#allocation8 + $0x348] sm:$0xff]
    %v543 = vld [vmem:[#allocation8 + $0x350] sm:$0xff]
    %v544 = vld [vmem:[#allocation8 + $0x358] sm:$0xff]
    %v545 = vld [vmem:[#allocation8 + $0x360] sm:$0xff]
    %v546 = vld [vmem:[#allocation8 + $0x368] sm:$0xff]
    %v547 = vld [vmem:[#allocation8 + $0x370] sm:$0xff]
    %v548 = vld [vmem:[#allocation8 + $0x378] sm:$0xff]
    %v549 = vld [vmem:[#allocation8 + $0x380] sm:$0xff]
    %v550 = vld [vmem:[#allocation8 + $0x388] sm:$0xff]
    %v551 = vld [vmem:[#allocation8 + $0x390] sm:$0xff]
    %v552 = vld [vmem:[#allocation8 + $0x398] sm:$0xff]
    %v553 = vld [vmem:[#allocation8 + $0x3a0] sm:$0xff]
    %v554 = vld [vmem:[#allocation8 + $0x3a8] sm:$0xff]
    %v555 = vld [vmem:[#allocation8 + $0x3b0] sm:$0xff]
    %v556 = vld [vmem:[#allocation8 + $0x3b8] sm:$0xff]
    %v557 = vld [vmem:[#allocation8 + $0x3c0] sm:$0xff]
    %v558 = vld [vmem:[#allocation8 + $0x3c8] sm:$0xff]
    %v559 = vld [vmem:[#allocation8 + $0x3d0] sm:$0xff]
    %v560 = vld [vmem:[#allocation8 + $0x3d8] sm:$0xff]
    %v561 = vld [vmem:[#allocation8 + $0x3e0] sm:$0xff]
    %v562 = vld [vmem:[#allocation8 + $0x3e8] sm:$0xff]
    %v563 = vld [vmem:[#allocation8 + $0x3f0] sm:$0xff]
    %v564 = vld [vmem:[#allocation8 + $0x3f8] sm:$0xff]
    %v693 = vunpack.c.l.b16 %v437
    %v694 = vunpack.c.h.b16 %v437
    %v695 = vunpack.c.l.b16 %v438
    %v696 = vunpack.c.h.b16 %v438
    %v697 = vunpack.c.l.b16 %v439
    %v698 = vunpack.c.h.b16 %v439
    %v699 = vunpack.c.l.b16 %v440
    %v700 = vunpack.c.h.b16 %v440
    %v701 = vunpack.c.l.b16 %v441
    %v702 = vunpack.c.h.b16 %v441
    %v703 = vunpack.c.l.b16 %v442
    %v704 = vunpack.c.h.b16 %v442
    %v705 = vunpack.c.l.b16 %v443
    %v706 = vunpack.c.h.b16 %v443
    %v707 = vunpack.c.l.b16 %v444
    %v708 = vunpack.c.h.b16 %v444
    %v709 = vunpack.c.l.b16 %v445
    %v710 = vunpack.c.h.b16 %v445
    %v711 = vunpack.c.l.b16 %v446
    %v712 = vunpack.c.h.b16 %v446
    %v713 = vunpack.c.l.b16 %v447
    %v714 = vunpack.c.h.b16 %v447
    %v715 = vunpack.c.l.b16 %v448
    %v716 = vunpack.c.h.b16 %v448
    %v717 = vunpack.c.l.b16 %v449
    %v718 = vunpack.c.h.b16 %v449
    %v719 = vunpack.c.l.b16 %v450
    %v720 = vunpack.c.h.b16 %v450
    %v721 = vunpack.c.l.b16 %v451
    %v722 = vunpack.c.h.b16 %v451
    %v723 = vunpack.c.l.b16 %v452
    %v724 = vunpack.c.h.b16 %v452
    %v725 = vunpack.c.l.b16 %v453
    %v726 = vunpack.c.h.b16 %v453
    %v727 = vunpack.c.l.b16 %v454
    %v728 = vunpack.c.h.b16 %v454
    %v729 = vunpack.c.l.b16 %v455
    %v730 = vunpack.c.h.b16 %v455
    %v731 = vunpack.c.l.b16 %v456
    %v732 = vunpack.c.h.b16 %v456
    %v733 = vunpack.c.l.b16 %v457
    %v734 = vunpack.c.h.b16 %v457
    %v735 = vunpack.c.l.b16 %v458
    %v736 = vunpack.c.h.b16 %v458
    %v737 = vunpack.c.l.b16 %v459
    %v738 = vunpack.c.h.b16 %v459
    %v739 = vunpack.c.l.b16 %v460
    %v740 = vunpack.c.h.b16 %v460
    %v741 = vunpack.c.l.b16 %v461
    %v742 = vunpack.c.h.b16 %v461
    %v743 = vunpack.c.l.b16 %v462
    %v744 = vunpack.c.h.b16 %v462
    %v745 = vunpack.c.l.b16 %v463
    %v746 = vunpack.c.h.b16 %v463
    %v747 = vunpack.c.l.b16 %v464
    %v748 = vunpack.c.h.b16 %v464
    %v749 = vunpack.c.l.b16 %v465
    %v750 = vunpack.c.h.b16 %v465
    %v751 = vunpack.c.l.b16 %v466
    %v752 = vunpack.c.h.b16 %v466
    %v753 = vunpack.c.l.b16 %v467
    %v754 = vunpack.c.h.b16 %v467
    %v755 = vunpack.c.l.b16 %v468
    %v756 = vunpack.c.h.b16 %v468
    %v757 = vunpack.c.l.b16 %v469
    %v758 = vunpack.c.h.b16 %v469
    %v759 = vunpack.c.l.b16 %v470
    %v760 = vunpack.c.h.b16 %v470
    %v761 = vunpack.c.l.b16 %v471
    %v762 = vunpack.c.h.b16 %v471
    %v763 = vunpack.c.l.b16 %v472
    %v764 = vunpack.c.h.b16 %v472
    %v765 = vunpack.c.l.b16 %v473
    %v766 = vunpack.c.h.b16 %v473
    %v767 = vunpack.c.l.b16 %v474
    %v768 = vunpack.c.h.b16 %v474
    %v769 = vunpack.c.l.b16 %v475
    %v770 = vunpack.c.h.b16 %v475
    %v771 = vunpack.c.l.b16 %v476
    %v772 = vunpack.c.h.b16 %v476
    %v773 = vunpack.c.l.b16 %v477
    %v774 = vunpack.c.h.b16 %v477
    %v775 = vunpack.c.l.b16 %v478
    %v776 = vunpack.c.h.b16 %v478
    %v777 = vunpack.c.l.b16 %v479
    %v778 = vunpack.c.h.b16 %v479
    %v779 = vunpack.c.l.b16 %v480
    %v780 = vunpack.c.h.b16 %v480
    %v781 = vunpack.c.l.b16 %v481
    %v782 = vunpack.c.h.b16 %v481
    %v783 = vunpack.c.l.b16 %v482
    %v784 = vunpack.c.h.b16 %v482
    %v785 = vunpack.c.l.b16 %v483
    %v786 = vunpack.c.h.b16 %v483
    %v787 = vunpack.c.l.b16 %v484
    %v788 = vunpack.c.h.b16 %v484
    %v789 = vunpack.c.l.b16 %v485
    %v790 = vunpack.c.h.b16 %v485
    %v791 = vunpack.c.l.b16 %v486
    %v792 = vunpack.c.h.b16 %v486
    %v793 = vunpack.c.l.b16 %v487
    %v794 = vunpack.c.h.b16 %v487
    %v795 = vunpack.c.l.b16 %v488
    %v796 = vunpack.c.h.b16 %v488
    %v797 = vunpack.c.l.b16 %v489
    %v798 = vunpack.c.h.b16 %v489
    %v799 = vunpack.c.l.b16 %v490
    %v800 = vunpack.c.h.b16 %v490
    %v801 = vunpack.c.l.b16 %v491
    %v802 = vunpack.c.h.b16 %v491
    %v803 = vunpack.c.l.b16 %v492
    %v804 = vunpack.c.h.b16 %v492
    %v805 = vunpack.c.l.b16 %v493
    %v806 = vunpack.c.h.b16 %v493
    %v807 = vunpack.c.l.b16 %v494
    %v808 = vunpack.c.h.b16 %v494
    %v809 = vunpack.c.l.b16 %v495
    %v810 = vunpack.c.h.b16 %v495
    %v811 = vunpack.c.l.b16 %v496
    %v812 = vunpack.c.h.b16 %v496
    %v813 = vunpack.c.l.b16 %v497
    %v814 = vunpack.c.h.b16 %v497
    %v815 = vunpack.c.l.b16 %v498
    %v816 = vunpack.c.h.b16 %v498
    %v817 = vunpack.c.l.b16 %v499
    %v818 = vunpack.c.h.b16 %v499
    %v819 = vunpack.c.l.b16 %v500
    %v820 = vunpack.c.h.b16 %v500
    %v821 = vunpack.c.l.b16 %v501
    %v822 = vunpack.c.h.b16 %v501
    %v823 = vunpack.c.l.b16 %v502
    %v824 = vunpack.c.h.b16 %v502
    %v825 = vunpack.c.l.b16 %v503
    %v826 = vunpack.c.h.b16 %v503
    %v827 = vunpack.c.l.b16 %v504
    %v828 = vunpack.c.h.b16 %v504
    %v829 = vunpack.c.l.b16 %v505
    %v830 = vunpack.c.h.b16 %v505
    %v831 = vunpack.c.l.b16 %v506
    %v832 = vunpack.c.h.b16 %v506
    %v833 = vunpack.c.l.b16 %v507
    %v834 = vunpack.c.h.b16 %v507
    %v835 = vunpack.c.l.b16 %v508
    %v836 = vunpack.c.h.b16 %v508
    %v837 = vunpack.c.l.b16 %v509
    %v838 = vunpack.c.h.b16 %v509
    %v839 = vunpack.c.l.b16 %v510
    %v840 = vunpack.c.h.b16 %v510
    %v841 = vunpack.c.l.b16 %v511
    %v842 = vunpack.c.h.b16 %v511
    %v843 = vunpack.c.l.b16 %v512
    %v844 = vunpack.c.h.b16 %v512
    %v845 = vunpack.c.l.b16 %v513
    %v846 = vunpack.c.h.b16 %v513
    %v847 = vunpack.c.l.b16 %v514
    %v848 = vunpack.c.h.b16 %v514
    %v849 = vunpack.c.l.b16 %v515
    %v850 = vunpack.c.h.b16 %v515
    %v851 = vunpack.c.l.b16 %v516
    %v852 = vunpack.c.h.b16 %v516
    %v853 = vunpack.c.l.b16 %v517
    %v854 = vunpack.c.h.b16 %v517
    %v855 = vunpack.c.l.b16 %v518
    %v856 = vunpack.c.h.b16 %v518
    %v857 = vunpack.c.l.b16 %v519
    %v858 = vunpack.c.h.b16 %v519
    %v859 = vunpack.c.l.b16 %v520
    %v860 = vunpack.c.h.b16 %v520
    %v861 = vunpack.c.l.b16 %v521
    %v862 = vunpack.c.h.b16 %v521
    %v863 = vunpack.c.l.b16 %v522
    %v864 = vunpack.c.h.b16 %v522
    %v865 = vunpack.c.l.b16 %v523
    %v866 = vunpack.c.h.b16 %v523
    %v867 = vunpack.c.l.b16 %v524
    %v868 = vunpack.c.h.b16 %v524
    %v869 = vunpack.c.l.b16 %v525
    %v870 = vunpack.c.h.b16 %v525
    %v871 = vunpack.c.l.b16 %v526
    %v872 = vunpack.c.h.b16 %v526
    %v873 = vunpack.c.l.b16 %v527
    %v874 = vunpack.c.h.b16 %v527
    %v875 = vunpack.c.l.b16 %v528
    %v876 = vunpack.c.h.b16 %v528
    %v877 = vunpack.c.l.b16 %v529
    %v878 = vunpack.c.h.b16 %v529
    %v879 = vunpack.c.l.b16 %v530
    %v880 = vunpack.c.h.b16 %v530
    %v881 = vunpack.c.l.b16 %v531
    %v882 = vunpack.c.h.b16 %v531
    %v883 = vunpack.c.l.b16 %v532
    %v884 = vunpack.c.h.b16 %v532
    %v885 = vunpack.c.l.b16 %v533
    %v886 = vunpack.c.h.b16 %v533
    %v887 = vunpack.c.l.b16 %v534
    %v888 = vunpack.c.h.b16 %v534
    %v889 = vunpack.c.l.b16 %v535
    %v890 = vunpack.c.h.b16 %v535
    %v891 = vunpack.c.l.b16 %v536
    %v892 = vunpack.c.h.b16 %v536
    %v893 = vunpack.c.l.b16 %v537
    %v894 = vunpack.c.h.b16 %v537
    %v895 = vunpack.c.l.b16 %v538
    %v896 = vunpack.c.h.b16 %v538
    %v897 = vunpack.c.l.b16 %v539
    %v898 = vunpack.c.h.b16 %v539
    %v899 = vunpack.c.l.b16 %v540
    %v900 = vunpack.c.h.b16 %v540
    %v901 = vunpack.c.l.b16 %v541
    %v902 = vunpack.c.h.b16 %v541
    %v903 = vunpack.c.l.b16 %v542
    %v904 = vunpack.c.h.b16 %v542
    %v905 = vunpack.c.l.b16 %v543
    %v906 = vunpack.c.h.b16 %v543
    %v907 = vunpack.c.l.b16 %v544
    %v908 = vunpack.c.h.b16 %v544
    %v909 = vunpack.c.l.b16 %v545
    %v910 = vunpack.c.h.b16 %v545
    %v911 = vunpack.c.l.b16 %v546
    %v912 = vunpack.c.h.b16 %v546
    %v913 = vunpack.c.l.b16 %v547
    %v914 = vunpack.c.h.b16 %v547
    %v915 = vunpack.c.l.b16 %v548
    %v916 = vunpack.c.h.b16 %v548
    %v917 = vunpack.c.l.b16 %v549
    %v918 = vunpack.c.h.b16 %v549
    %v919 = vunpack.c.l.b16 %v550
    %v920 = vunpack.c.h.b16 %v550
    %v921 = vunpack.c.l.b16 %v551
    %v922 = vunpack.c.h.b16 %v551
    %v923 = vunpack.c.l.b16 %v552
    %v924 = vunpack.c.h.b16 %v552
    %v925 = vunpack.c.l.b16 %v553
    %v926 = vunpack.c.h.b16 %v553
    %v927 = vunpack.c.l.b16 %v554
    %v928 = vunpack.c.h.b16 %v554
    %v929 = vunpack.c.l.b16 %v555
    %v930 = vunpack.c.h.b16 %v555
    %v931 = vunpack.c.l.b16 %v556
    %v932 = vunpack.c.h.b16 %v556
    %v933 = vunpack.c.l.b16 %v557
    %v934 = vunpack.c.h.b16 %v557
    %v935 = vunpack.c.l.b16 %v558
    %v936 = vunpack.c.h.b16 %v558
    %v937 = vunpack.c.l.b16 %v559
    %v938 = vunpack.c.h.b16 %v559
    %v939 = vunpack.c.l.b16 %v560
    %v940 = vunpack.c.h.b16 %v560
    %v941 = vunpack.c.l.b16 %v561
    %v942 = vunpack.c.h.b16 %v561
    %v943 = vunpack.c.l.b16 %v562
    %v944 = vunpack.c.h.b16 %v562
    %v945 = vunpack.c.l.b16 %v563
    %v946 = vunpack.c.h.b16 %v563
    %v947 = vunpack.c.l.b16 %v564
    %v948 = vunpack.c.h.b16 %v564
    %v949 = vpack.c.b16 %v701, %v693
    %v950 = vpack.c.b16 %v702, %v694
    %v951 = vpack.c.b16 %v703, %v695
    %v952 = vpack.c.b16 %v704, %v696
    %v953 = vpack.c.b16 %v705, %v697
    %v954 = vpack.c.b16 %v706, %v698
    %v955 = vpack.c.b16 %v707, %v699
    %v956 = vpack.c.b16 %v708, %v700
    %v957 = vpack.c.b16 %v717, %v709
    %v958 = vpack.c.b16 %v718, %v710
    %v959 = vpack.c.b16 %v719, %v711
    %v960 = vpack.c.b16 %v720, %v712
    %v961 = vpack.c.b16 %v721, %v713
    %v962 = vpack.c.b16 %v722, %v714
    %v963 = vpack.c.b16 %v723, %v715
    %v964 = vpack.c.b16 %v724, %v716
    %v965 = vpack.c.b16 %v733, %v725
    %v966 = vpack.c.b16 %v734, %v726
    %v967 = vpack.c.b16 %v735, %v727
    %v968 = vpack.c.b16 %v736, %v728
    %v969 = vpack.c.b16 %v737, %v729
    %v970 = vpack.c.b16 %v738, %v730
    %v971 = vpack.c.b16 %v739, %v731
    %v972 = vpack.c.b16 %v740, %v732
    %v973 = vpack.c.b16 %v749, %v741
    %v974 = vpack.c.b16 %v750, %v742
    %v975 = vpack.c.b16 %v751, %v743
    %v976 = vpack.c.b16 %v752, %v744
    %v977 = vpack.c.b16 %v753, %v745
    %v978 = vpack.c.b16 %v754, %v746
    %v979 = vpack.c.b16 %v755, %v747
    %v980 = vpack.c.b16 %v756, %v748
    %v981 = vpack.c.b16 %v765, %v757
    %v982 = vpack.c.b16 %v766, %v758
    %v983 = vpack.c.b16 %v767, %v759
    %v984 = vpack.c.b16 %v768, %v760
    %v985 = vpack.c.b16 %v769, %v761
    %v986 = vpack.c.b16 %v770, %v762
    %v987 = vpack.c.b16 %v771, %v763
    %v988 = vpack.c.b16 %v772, %v764
    %v989 = vpack.c.b16 %v781, %v773
    %v990 = vpack.c.b16 %v782, %v774
    %v991 = vpack.c.b16 %v783, %v775
    %v992 = vpack.c.b16 %v784, %v776
    %v993 = vpack.c.b16 %v785, %v777
    %v994 = vpack.c.b16 %v786, %v778
    %v995 = vpack.c.b16 %v787, %v779
    %v996 = vpack.c.b16 %v788, %v780
    %v997 = vpack.c.b16 %v797, %v789
    %v998 = vpack.c.b16 %v798, %v790
    %v999 = vpack.c.b16 %v799, %v791
    %v1000 = vpack.c.b16 %v800, %v792
    %v1001 = vpack.c.b16 %v801, %v793
    %v1002 = vpack.c.b16 %v802, %v794
    %v1003 = vpack.c.b16 %v803, %v795
    %v1004 = vpack.c.b16 %v804, %v796
    %v1005 = vpack.c.b16 %v813, %v805
    %v1006 = vpack.c.b16 %v814, %v806
    %v1007 = vpack.c.b16 %v815, %v807
    %v1008 = vpack.c.b16 %v816, %v808
    %v1009 = vpack.c.b16 %v817, %v809
    %v1010 = vpack.c.b16 %v818, %v810
    %v1011 = vpack.c.b16 %v819, %v811
    %v1012 = vpack.c.b16 %v820, %v812
    %v1013 = vpack.c.b16 %v829, %v821
    %v1014 = vpack.c.b16 %v830, %v822
    %v1015 = vpack.c.b16 %v831, %v823
    %v1016 = vpack.c.b16 %v832, %v824
    %v1017 = vpack.c.b16 %v833, %v825
    %v1018 = vpack.c.b16 %v834, %v826
    %v1019 = vpack.c.b16 %v835, %v827
    %v1020 = vpack.c.b16 %v836, %v828
    %v1021 = vpack.c.b16 %v845, %v837
    %v1022 = vpack.c.b16 %v846, %v838
    %v1023 = vpack.c.b16 %v847, %v839
    %v1024 = vpack.c.b16 %v848, %v840
    %v1025 = vpack.c.b16 %v849, %v841
    %v1026 = vpack.c.b16 %v850, %v842
    %v1027 = vpack.c.b16 %v851, %v843
    %v1028 = vpack.c.b16 %v852, %v844
    %v1029 = vpack.c.b16 %v861, %v853
    %v1030 = vpack.c.b16 %v862, %v854
    %v1031 = vpack.c.b16 %v863, %v855
    %v1032 = vpack.c.b16 %v864, %v856
    %v1033 = vpack.c.b16 %v865, %v857
    %v1034 = vpack.c.b16 %v866, %v858
    %v1035 = vpack.c.b16 %v867, %v859
    %v1036 = vpack.c.b16 %v868, %v860
    %v1037 = vpack.c.b16 %v877, %v869
    %v1038 = vpack.c.b16 %v878, %v870
    %v1039 = vpack.c.b16 %v879, %v871
    %v1040 = vpack.c.b16 %v880, %v872
    %v1041 = vpack.c.b16 %v881, %v873
    %v1042 = vpack.c.b16 %v882, %v874
    %v1043 = vpack.c.b16 %v883, %v875
    %v1044 = vpack.c.b16 %v884, %v876
    %v1045 = vpack.c.b16 %v893, %v885
    %v1046 = vpack.c.b16 %v894, %v886
    %v1047 = vpack.c.b16 %v895, %v887
    %v1048 = vpack.c.b16 %v896, %v888
    %v1049 = vpack.c.b16 %v897, %v889
    %v1050 = vpack.c.b16 %v898, %v890
    %v1051 = vpack.c.b16 %v899, %v891
    %v1052 = vpack.c.b16 %v900, %v892
    %v1053 = vpack.c.b16 %v909, %v901
    %v1054 = vpack.c.b16 %v910, %v902
    %v1055 = vpack.c.b16 %v911, %v903
    %v1056 = vpack.c.b16 %v912, %v904
    %v1057 = vpack.c.b16 %v913, %v905
    %v1058 = vpack.c.b16 %v914, %v906
    %v1059 = vpack.c.b16 %v915, %v907
    %v1060 = vpack.c.b16 %v916, %v908
    %v1061 = vpack.c.b16 %v925, %v917
    %v1062 = vpack.c.b16 %v926, %v918
    %v1063 = vpack.c.b16 %v927, %v919
    %v1064 = vpack.c.b16 %v928, %v920
    %v1065 = vpack.c.b16 %v929, %v921
    %v1066 = vpack.c.b16 %v930, %v922
    %v1067 = vpack.c.b16 %v931, %v923
    %v1068 = vpack.c.b16 %v932, %v924
    %v1069 = vpack.c.b16 %v941, %v933
    %v1070 = vpack.c.b16 %v942, %v934
    %v1071 = vpack.c.b16 %v943, %v935
    %v1072 = vpack.c.b16 %v944, %v936
    %v1073 = vpack.c.b16 %v945, %v937
    %v1074 = vpack.c.b16 %v946, %v938
    %v1075 = vpack.c.b16 %v947, %v939
    %v1076 = vpack.c.b16 %v948, %v940
    %1205 = vmatprep.subr.bf16.mxu0 %v1006
    %1206 = vmatpush1.bf16.msra.mxu0 %v1005
    %1207 = vmatprep.subr.bf16.mxu0 %v998
    %1208 = vmatpush1.bf16.msra.mxu0 %v997
    %1209 = vmatprep.subr.bf16.mxu0 %v990
    %1210 = vmatpush1.bf16.msra.mxu0 %v989
    %1211 = vmatprep.subr.bf16.mxu0 %v982
    %1212 = vmatpush1.bf16.msra.mxu0 %v981
    %1213 = vmatprep.subr.bf16.mxu0 %v974
    %1214 = vmatpush1.bf16.msra.mxu0 %v973
    %1215 = vmatprep.subr.bf16.mxu0 %v966
    %1216 = vmatpush1.bf16.msra.mxu0 %v965
    %1217 = vmatprep.subr.bf16.mxu0 %v958
    %1218 = vmatpush1.bf16.msra.mxu0 %v957
    %1219 = vmatprep.subr.bf16.mxu0 %v950
    %1220 = vmatpush1.bf16.msra.mxu0 %v949
    %1221 = vmatprep.subr.bf16.mxu0 %v1070
    %1222 = vmatpush2.bf16.msra.mxu0 %v1069
    %1223 = vmatprep.subr.bf16.mxu0 %v1062
    %1224 = vmatpush2.bf16.msra.mxu0 %v1061
    %1225 = vmatprep.subr.bf16.mxu0 %v1054
    %1226 = vmatpush2.bf16.msra.mxu0 %v1053
    %1227 = vmatprep.subr.bf16.mxu0 %v1046
    %1228 = vmatpush2.bf16.msra.mxu0 %v1045
    %1229 = vmatprep.subr.bf16.mxu0 %v1038
    %1230 = vmatpush2.bf16.msra.mxu0 %v1037
    %1231 = vmatprep.subr.bf16.mxu0 %v1030
    %1232 = vmatpush2.bf16.msra.mxu0 %v1029
    %1233 = vmatprep.subr.bf16.mxu0 %v1022
    %1234 = vmatpush2.bf16.msra.mxu0 %v1021
    %1235 = vmatprep.subr.bf16.mxu0 %v1014
    %1236 = vmatpush2.bf16.msra.mxu0 %v1013
    %1237 = vmatprep.mubr.bf16.mxu0 %v434
    %1238 = vmatmul.mubr.bf16.gmra.mxu0 %v433
    %v1239 = vpop.f32.mrf.mxu0
    %v1240 = vadd.f32 0.0, %v1239
    %v1241 = vpop.f32.mrf.mxu0
    %v1242 = vadd.f32 0.0, %v1241
    %v1243 = vpop.f32.mrf.mxu0
    %v1244 = vadd.f32 0.0, %v1243
    %v1245 = vpop.f32.mrf.mxu0
    %v1246 = vadd.f32 0.0, %v1245
    %1247 = vmatprep.mubr.bf16.mxu0 %v436
    %1248 = vmatmul.mubr.bf16.gmra.mxu0 %v435
    %v1249 = vpop.f32.mrf.mxu0
    %v1250 = vadd.f32 0.0, %v1249
    %v1251 = vpop.f32.mrf.mxu0
    %v1252 = vadd.f32 0.0, %v1251
    %v1253 = vpop.f32.mrf.mxu0
    %v1254 = vadd.f32 0.0, %v1253
    %v1255 = vpop.f32.mrf.mxu0
    %v1256 = vadd.f32 0.0, %v1255
    %1257 = vdwg.mxu0
    %1258 = vmatprep.subr.bf16.mxu0 %v1008
    %1259 = vmatpush1.bf16.msra.mxu0 %v1007
    %1260 = vmatprep.subr.bf16.mxu0 %v1000
    %1261 = vmatpush1.bf16.msra.mxu0 %v999
    %1262 = vmatprep.subr.bf16.mxu0 %v992
    %1263 = vmatpush1.bf16.msra.mxu0 %v991
    %1264 = vmatprep.subr.bf16.mxu0 %v984
    %1265 = vmatpush1.bf16.msra.mxu0 %v983
    %1266 = vmatprep.subr.bf16.mxu0 %v976
    %1267 = vmatpush1.bf16.msra.mxu0 %v975
    %1268 = vmatprep.subr.bf16.mxu0 %v968
    %1269 = vmatpush1.bf16.msra.mxu0 %v967
    %1270 = vmatprep.subr.bf16.mxu0 %v960
    %1271 = vmatpush1.bf16.msra.mxu0 %v959
    %1272 = vmatprep.subr.bf16.mxu0 %v952
    %1273 = vmatpush1.bf16.msra.mxu0 %v951
    %1274 = vmatprep.subr.bf16.mxu0 %v1072
    %1275 = vmatpush2.bf16.msra.mxu0 %v1071
    %1276 = vmatprep.subr.bf16.mxu0 %v1064
    %1277 = vmatpush2.bf16.msra.mxu0 %v1063
    %1278 = vmatprep.subr.bf16.mxu0 %v1056
    %1279 = vmatpush2.bf16.msra.mxu0 %v1055
    %1280 = vmatprep.subr.bf16.mxu0 %v1048
    %1281 = vmatpush2.bf16.msra.mxu0 %v1047
    %1282 = vmatprep.subr.bf16.mxu0 %v1040
    %1283 = vmatpush2.bf16.msra.mxu0 %v1039
    %1284 = vmatprep.subr.bf16.mxu0 %v1032
    %1285 = vmatpush2.bf16.msra.mxu0 %v1031
    %1286 = vmatprep.subr.bf16.mxu0 %v1024
    %1287 = vmatpush2.bf16.msra.mxu0 %v1023
    %1288 = vmatprep.subr.bf16.mxu0 %v1016
    %1289 = vmatpush2.bf16.msra.mxu0 %v1015
    %1290 = vmatprep.mubr.bf16.mxu0 %v434
    %1291 = vmatmul.mubr.bf16.gmra.mxu0 %v433
    %v1292 = vpop.f32.mrf.mxu0
    %v1293 = vadd.f32 0.0, %v1292
    %v1294 = vpop.f32.mrf.mxu0
    %v1295 = vadd.f32 0.0, %v1294
    %v1296 = vpop.f32.mrf.mxu0
    %v1297 = vadd.f32 0.0, %v1296
    %v1298 = vpop.f32.mrf.mxu0
    %v1299 = vadd.f32 0.0, %v1298
    %1300 = vmatprep.mubr.bf16.mxu0 %v436
    %1301 = vmatmul.mubr.bf16.gmra.mxu0 %v435
    %v1302 = vpop.f32.mrf.mxu0
    %v1303 = vadd.f32 0.0, %v1302
    %v1304 = vpop.f32.mrf.mxu0
    %v1305 = vadd.f32 0.0, %v1304
    %v1306 = vpop.f32.mrf.mxu0
    %v1307 = vadd.f32 0.0, %v1306
    %v1308 = vpop.f32.mrf.mxu0
    %v1309 = vadd.f32 0.0, %v1308
    %1310 = vdwg.mxu0
    %1311 = vmatprep.subr.bf16.mxu0 %v1010
    %1312 = vmatpush1.bf16.msra.mxu0 %v1009
    %1313 = vmatprep.subr.bf16.mxu0 %v1002
    %1314 = vmatpush1.bf16.msra.mxu0 %v1001
    %1315 = vmatprep.subr.bf16.mxu0 %v994
    %1316 = vmatpush1.bf16.msra.mxu0 %v993
    %1317 = vmatprep.subr.bf16.mxu0 %v986
    %1318 = vmatpush1.bf16.msra.mxu0 %v985
    %1319 = vmatprep.subr.bf16.mxu0 %v978
    %1320 = vmatpush1.bf16.msra.mxu0 %v977
    %1321 = vmatprep.subr.bf16.mxu0 %v970
    %1322 = vmatpush1.bf16.msra.mxu0 %v969
    %1323 = vmatprep.subr.bf16.mxu0 %v962
    %1324 = vmatpush1.bf16.msra.mxu0 %v961
    %1325 = vmatprep.subr.bf16.mxu0 %v954
    %1326 = vmatpush1.bf16.msra.mxu0 %v953
    %1327 = vmatprep.subr.bf16.mxu0 %v1074
    %1328 = vmatpush2.bf16.msra.mxu0 %v1073
    %1329 = vmatprep.subr.bf16.mxu0 %v1066
    %1330 = vmatpush2.bf16.msra.mxu0 %v1065
    %1331 = vmatprep.subr.bf16.mxu0 %v1058
    %1332 = vmatpush2.bf16.msra.mxu0 %v1057
    %1333 = vmatprep.subr.bf16.mxu0 %v1050
    %1334 = vmatpush2.bf16.msra.mxu0 %v1049
    %1335 = vmatprep.subr.bf16.mxu0 %v1042
    %1336 = vmatpush2.bf16.msra.mxu0 %v1041
    %1337 = vmatprep.subr.bf16.mxu0 %v1034
    %1338 = vmatpush2.bf16.msra.mxu0 %v1033
    %1339 = vmatprep.subr.bf16.mxu0 %v1026
    %1340 = vmatpush2.bf16.msra.mxu0 %v1025
    %1341 = vmatprep.subr.bf16.mxu0 %v1018
    %1342 = vmatpush2.bf16.msra.mxu0 %v1017
    %1343 = vmatprep.mubr.bf16.mxu0 %v434
    %1344 = vmatmul.mubr.bf16.gmra.mxu0 %v433
    %v1345 = vpop.f32.mrf.mxu0
    %v1346 = vadd.f32 0.0, %v1345
    %v1347 = vpop.f32.mrf.mxu0
    %v1348 = vadd.f32 0.0, %v1347
    %v1349 = vpop.f32.mrf.mxu0
    %v1350 = vadd.f32 0.0, %v1349
    %v1351 = vpop.f32.mrf.mxu0
    %v1352 = vadd.f32 0.0, %v1351
    %1353 = vmatprep.mubr.bf16.mxu0 %v436
    %1354 = vmatmul.mubr.bf16.gmra.mxu0 %v435
    %v1355 = vpop.f32.mrf.mxu0
    %v1356 = vadd.f32 0.0, %v1355
    %v1357 = vpop.f32.mrf.mxu0
    %v1358 = vadd.f32 0.0, %v1357
    %v1359 = vpop.f32.mrf.mxu0
    %v1360 = vadd.f32 0.0, %v1359
    %v1361 = vpop.f32.mrf.mxu0
    %v1362 = vadd.f32 0.0, %v1361
    %1363 = vdwg.mxu0
    %1364 = vmatprep.subr.bf16.mxu0 %v1012
    %1365 = vmatpush1.bf16.msra.mxu0 %v1011
    %1366 = vmatprep.subr.bf16.mxu0 %v1004
    %1367 = vmatpush1.bf16.msra.mxu0 %v1003
    %1368 = vmatprep.subr.bf16.mxu0 %v996
    %1369 = vmatpush1.bf16.msra.mxu0 %v995
    %1370 = vmatprep.subr.bf16.mxu0 %v988
    %1371 = vmatpush1.bf16.msra.mxu0 %v987
    %1372 = vmatprep.subr.bf16.mxu0 %v980
    %1373 = vmatpush1.bf16.msra.mxu0 %v979
    %1374 = vmatprep.subr.bf16.mxu0 %v972
    %1375 = vmatpush1.bf16.msra.mxu0 %v971
    %1376 = vmatprep.subr.bf16.mxu0 %v964
    %1377 = vmatpush1.bf16.msra.mxu0 %v963
    %1378 = vmatprep.subr.bf16.mxu0 %v956
    %1379 = vmatpush1.bf16.msra.mxu0 %v955
    %1380 = vmatprep.subr.bf16.mxu0 %v1076
    %1381 = vmatpush2.bf16.msra.mxu0 %v1075
    %1382 = vmatprep.subr.bf16.mxu0 %v1068
    %1383 = vmatpush2.bf16.msra.mxu0 %v1067
    %1384 = vmatprep.subr.bf16.mxu0 %v1060
    %1385 = vmatpush2.bf16.msra.mxu0 %v1059
    %1386 = vmatprep.subr.bf16.mxu0 %v1052
    %1387 = vmatpush2.bf16.msra.mxu0 %v1051
    %1388 = vmatprep.subr.bf16.mxu0 %v1044
    %1389 = vmatpush2.bf16.msra.mxu0 %v1043
    %1390 = vmatprep.subr.bf16.mxu0 %v1036
    %1391 = vmatpush2.bf16.msra.mxu0 %v1035
    %1392 = vmatprep.subr.bf16.mxu0 %v1028
    %1393 = vmatpush2.bf16.msra.mxu0 %v1027
    %1394 = vmatprep.subr.bf16.mxu0 %v1020
    %1395 = vmatpush2.bf16.msra.mxu0 %v1019
    %1396 = vmatprep.mubr.bf16.mxu0 %v434
    %1397 = vmatmul.mubr.bf16.gmra.mxu0 %v433
    %v1398 = vpop.f32.mrf.mxu0
    %v1399 = vadd.f32 0.0, %v1398
    %v1400 = vpop.f32.mrf.mxu0
    %v1401 = vadd.f32 0.0, %v1400
    %v1402 = vpop.f32.mrf.mxu0
    %v1403 = vadd.f32 0.0, %v1402
    %v1404 = vpop.f32.mrf.mxu0
    %v1405 = vadd.f32 0.0, %v1404
    %1406 = vmatprep.mubr.bf16.mxu0 %v436
    %1407 = vmatmul.mubr.bf16.gmra.mxu0 %v435
    %v1408 = vpop.f32.mrf.mxu0
    %v1409 = vadd.f32 0.0, %v1408
    %v1410 = vpop.f32.mrf.mxu0
    %v1411 = vadd.f32 0.0, %v1410
    %v1412 = vpop.f32.mrf.mxu0
    %v1413 = vadd.f32 0.0, %v1412
    %v1414 = vpop.f32.mrf.mxu0
    %v1415 = vadd.f32 0.0, %v1414
    %1416 = vdwg.mxu0
    %v1417 = vmax.f32 %v1240, %v1244
    %v1418 = vrot.slane %v1417, 4
    %v1419 = vmax.f32 %v1417, %v1418
    %v1420 = vrot.slane %v1419, 2
    %v1421 = vmax.f32 %v1419, %v1420
    %v1422 = vrot.slane %v1421, 1
    %v1423 = vmax.f32 %v1421, %v1422
    %v1424 = vmax.f32 %v1242, %v1246
    %v1425 = vrot.slane %v1424, 4
    %v1426 = vmax.f32 %v1424, %v1425
    %v1427 = vrot.slane %v1426, 2
    %v1428 = vmax.f32 %v1426, %v1427
    %v1429 = vrot.slane %v1428, 1
    %v1430 = vmax.f32 %v1428, %v1429
    %v1431 = vmax.f32 %v1293, %v1297
    %v1432 = vrot.slane %v1431, 4
    %v1433 = vmax.f32 %v1431, %v1432
    %v1434 = vrot.slane %v1433, 2
    %v1435 = vmax.f32 %v1433, %v1434
    %v1436 = vrot.slane %v1435, 1
    %v1437 = vmax.f32 %v1435, %v1436
    %v1438 = vmax.f32 %v1295, %v1299
    %v1439 = vrot.slane %v1438, 4
    %v1440 = vmax.f32 %v1438, %v1439
    %v1441 = vrot.slane %v1440, 2
    %v1442 = vmax.f32 %v1440, %v1441
    %v1443 = vrot.slane %v1442, 1
    %v1444 = vmax.f32 %v1442, %v1443
    %v1445 = vmax.f32 %v1346, %v1350
    %v1446 = vrot.slane %v1445, 4
    %v1447 = vmax.f32 %v1445, %v1446
    %v1448 = vrot.slane %v1447, 2
    %v1449 = vmax.f32 %v1447, %v1448
    %v1450 = vrot.slane %v1449, 1
    %v1451 = vmax.f32 %v1449, %v1450
    %v1452 = vmax.f32 %v1348, %v1352
    %v1453 = vrot.slane %v1452, 4
    %v1454 = vmax.f32 %v1452, %v1453
    %v1455 = vrot.slane %v1454, 2
    %v1456 = vmax.f32 %v1454, %v1455
    %v1457 = vrot.slane %v1456, 1
    %v1458 = vmax.f32 %v1456, %v1457
    %v1459 = vmax.f32 %v1399, %v1403
    %v1460 = vrot.slane %v1459, 4
    %v1461 = vmax.f32 %v1459, %v1460
    %v1462 = vrot.slane %v1461, 2
    %v1463 = vmax.f32 %v1461, %v1462
    %v1464 = vrot.slane %v1463, 1
    %v1465 = vmax.f32 %v1463, %v1464
    %v1466 = vmax.f32 %v1401, %v1405
    %v1467 = vrot.slane %v1466, 4
    %v1468 = vmax.f32 %v1466, %v1467
    %v1469 = vrot.slane %v1468, 2
    %v1470 = vmax.f32 %v1468, %v1469
    %v1471 = vrot.slane %v1470, 1
    %v1472 = vmax.f32 %v1470, %v1471
    %v1473 = vmax.f32 %v1250, %v1254
    %v1474 = vrot.slane %v1473, 4
    %v1475 = vmax.f32 %v1473, %v1474
    %v1476 = vrot.slane %v1475, 2
    %v1477 = vmax.f32 %v1475, %v1476
    %v1478 = vrot.slane %v1477, 1
    %v1479 = vmax.f32 %v1477, %v1478
    %v1480 = vmax.f32 %v1252, %v1256
    %v1481 = vrot.slane %v1480, 4
    %v1482 = vmax.f32 %v1480, %v1481
    %v1483 = vrot.slane %v1482, 2
    %v1484 = vmax.f32 %v1482, %v1483
    %v1485 = vrot.slane %v1484, 1
    %v1486 = vmax.f32 %v1484, %v1485
    %v1487 = vmax.f32 %v1303, %v1307
    %v1488 = vrot.slane %v1487, 4
    %v1489 = vmax.f32 %v1487, %v1488
    %v1490 = vrot.slane %v1489, 2
    %v1491 = vmax.f32 %v1489, %v1490
    %v1492 = vrot.slane %v1491, 1
    %v1493 = vmax.f32 %v1491, %v1492
    %v1494 = vmax.f32 %v1305, %v1309
    %v1495 = vrot.slane %v1494, 4
    %v1496 = vmax.f32 %v1494, %v1495
    %v1497 = vrot.slane %v1496, 2
    %v1498 = vmax.f32 %v1496, %v1497
    %v1499 = vrot.slane %v1498, 1
    %v1500 = vmax.f32 %v1498, %v1499
    %v1501 = vmax.f32 %v1356, %v1360
    %v1502 = vrot.slane %v1501, 4
    %v1503 = vmax.f32 %v1501, %v1502
    %v1504 = vrot.slane %v1503, 2
    %v1505 = vmax.f32 %v1503, %v1504
    %v1506 = vrot.slane %v1505, 1
    %v1507 = vmax.f32 %v1505, %v1506
    %v1508 = vmax.f32 %v1358, %v1362
    %v1509 = vrot.slane %v1508, 4
    %v1510 = vmax.f32 %v1508, %v1509
    %v1511 = vrot.slane %v1510, 2
    %v1512 = vmax.f32 %v1510, %v1511
    %v1513 = vrot.slane %v1512, 1
    %v1514 = vmax.f32 %v1512, %v1513
    %v1515 = vmax.f32 %v1409, %v1413
    %v1516 = vrot.slane %v1515, 4
    %v1517 = vmax.f32 %v1515, %v1516
    %v1518 = vrot.slane %v1517, 2
    %v1519 = vmax.f32 %v1517, %v1518
    %v1520 = vrot.slane %v1519, 1
    %v1521 = vmax.f32 %v1519, %v1520
    %v1522 = vmax.f32 %v1411, %v1415
    %v1523 = vrot.slane %v1522, 4
    %v1524 = vmax.f32 %v1522, %v1523
    %v1525 = vrot.slane %v1524, 2
    %v1526 = vmax.f32 %v1524, %v1525
    %v1527 = vrot.slane %v1526, 1
    %v1528 = vmax.f32 %v1526, %v1527
    %v1529 = vld [vmem:[%s8] sm:$0xff]
    %v1531 = vlaneseq
    %v1532 = vshrl.u32 %v1531, 7
    %v1533 = vsub.s32 0, %v1532
    %v1534 = vrot.slane %v1529, %v1533
    %v1535 = vlaneseq
    %v1536 = vshrl.u32 %v1535, 7
    %v1537 = vsub.s32 1, %v1536
    %v1538 = vrot.slane %v1529, %v1537
    %v1539 = vlaneseq
    %v1540 = vshrl.u32 %v1539, 7
    %v1541 = vsub.s32 2, %v1540
    %v1542 = vrot.slane %v1529, %v1541
    %v1543 = vlaneseq
    %v1544 = vshrl.u32 %v1543, 7
    %v1545 = vsub.s32 3, %v1544
    %v1546 = vrot.slane %v1529, %v1545
    %v1547 = vlaneseq
    %v1548 = vshrl.u32 %v1547, 7
    %v1549 = vsub.s32 4, %v1548
    %v1550 = vrot.slane %v1529, %v1549
    %v1551 = vlaneseq
    %v1552 = vshrl.u32 %v1551, 7
    %v1553 = vsub.s32 5, %v1552
    %v1554 = vrot.slane %v1529, %v1553
    %v1555 = vlaneseq
    %v1556 = vshrl.u32 %v1555, 7
    %v1557 = vsub.s32 6, %v1556
    %v1558 = vrot.slane %v1529, %v1557
    %v1559 = vlaneseq
    %v1560 = vshrl.u32 %v1559, 7
    %v1561 = vsub.s32 7, %v1560
    %v1562 = vrot.slane %v1529, %v1561
    %v1571 = vadd.f32 %v1423, %v1534
    %v1572 = vadd.f32 %v1430, %v1538
    %v1573 = vadd.f32 %v1437, %v1542
    %v1574 = vadd.f32 %v1444, %v1546
    %v1575 = vadd.f32 %v1451, %v1550
    %v1576 = vadd.f32 %v1458, %v1554
    %v1577 = vadd.f32 %v1465, %v1558
    %v1578 = vadd.f32 %v1472, %v1562
    %v1579 = vadd.f32 %v1479, %v1534
    %v1580 = vadd.f32 %v1486, %v1538
    %v1581 = vadd.f32 %v1493, %v1542
    %v1582 = vadd.f32 %v1500, %v1546
    %v1583 = vadd.f32 %v1507, %v1550
    %v1584 = vadd.f32 %v1514, %v1554
    %v1585 = vadd.f32 %v1521, %v1558
    %v1586 = vadd.f32 %v1528, %v1562
    %p1587 = scmp.eq.s32.totalorder 0, 0
    // Predicated region
    $region54: #{tpu_custom_call.1} parent=1 // pred_check
      %p1588 = pneg %p1587
    $region55: #{tpu_custom_call.1} parent=1 // pred_check_branch
      %1590 = sbr.rel (%p1588) target = $region57
    $region56: #{tpu_custom_call.1} parent=1 // pred_region
      %v1607 = vcombine.low %v1571, %v1572
      %v1608 = vcombine.low %v1573, %v1574
      %v1610 = vunpack.c.l.s4 1983009808
      %v1611 = vunpack.c.0.s8 %v1610
      %v1612 = vlaneseq
      %v1613 = vshrl.u32 %v1612, 7
      %v1614 = vsub.s32 %v1611, %v1613
      %v1615 = vrot.slane %v1607, %v1614
      %v1617 = vunpack.c.l.s4 1983009808
      %v1618 = vunpack.c.0.s8 %v1617
      %v1619 = vlaneseq
      %v1620 = vshrl.u32 %v1619, 7
      %v1621 = vsub.s32 %v1618, %v1620
      %v1622 = vrot.slane %v1608, %v1621
      %v1623 = vcombine.low %v1615, %v1622
      %v1624 = vcombine.low %v1575, %v1576
      %v1625 = vcombine.low %v1577, %v1578
      %v1627 = vunpack.c.l.s4 1983009808
      %v1628 = vunpack.c.0.s8 %v1627
      %v1629 = vlaneseq
      %v1630 = vshrl.u32 %v1629, 7
      %v1631 = vsub.s32 %v1628, %v1630
      %v1632 = vrot.slane %v1624, %v1631
      %v1634 = vunpack.c.l.s4 1983009808
      %v1635 = vunpack.c.0.s8 %v1634
      %v1636 = vlaneseq
      %v1637 = vshrl.u32 %v1636, 7
      %v1638 = vsub.s32 %v1635, %v1637
      %v1639 = vrot.slane %v1625, %v1638
      %v1640 = vcombine.low %v1632, %v1639
      %v1641 = vcombine.low %v1579, %v1580
      %v1642 = vcombine.low %v1581, %v1582
      %v1644 = vunpack.c.l.s4 1983009808
      %v1645 = vunpack.c.0.s8 %v1644
      %v1646 = vlaneseq
      %v1647 = vshrl.u32 %v1646, 7
      %v1648 = vsub.s32 %v1645, %v1647
      %v1649 = vrot.slane %v1641, %v1648
      %v1651 = vunpack.c.l.s4 1983009808
      %v1652 = vunpack.c.0.s8 %v1651
      %v1653 = vlaneseq
      %v1654 = vshrl.u32 %v1653, 7
      %v1655 = vsub.s32 %v1652, %v1654
      %v1656 = vrot.slane %v1642, %v1655
      %v1657 = vcombine.low %v1649, %v1656
      %v1658 = vcombine.low %v1583, %v1584
      %v1659 = vcombine.low %v1585, %v1586
      %v1661 = vunpack.c.l.s4 1983009808
      %v1662 = vunpack.c.0.s8 %v1661
      %v1663 = vlaneseq
      %v1664 = vshrl.u32 %v1663, 7
      %v1665 = vsub.s32 %v1662, %v1664
      %v1666 = vrot.slane %v1658, %v1665
      %v1668 = vunpack.c.l.s4 1983009808
      %v1669 = vunpack.c.0.s8 %v1668
      %v1670 = vlaneseq
      %v1671 = vshrl.u32 %v1670, 7
      %v1672 = vsub.s32 %v1669, %v1671
      %v1673 = vrot.slane %v1659, %v1672
      %v1674 = vcombine.low %v1666, %v1673
      %vm1675 = vcmask 1044484
      %v1676 = vsel %vm1675, %v1623, %v1623
      %vm1677 = vcmask 1046534
      %v1678 = vsel %vm1677, %v1623, %v1676
      %v1679 = vrot.slane %v1657, 7
      %vm1680 = vcmask 1041409
      %v1681 = vsel %vm1680, %v1679, %v1678
      %vm1682 = vcmask 1043459
      %v1683 = vsel %vm1682, %v1679, %v1681
      %vm1684 = vcmask 1045509
      %v1685 = vsel %vm1684, %v1679, %v1683
      %vm1686 = vcmask 1047559
      %v1687 = vsel %vm1686, %v1679, %v1685
      %v1688 = vsel %vm1675, %v1640, %v1640
      %v1689 = vsel %vm1677, %v1640, %v1688
      %v1690 = vrot.slane %v1674, 7
      %v1691 = vsel %vm1680, %v1690, %v1689
      %v1692 = vsel %vm1682, %v1690, %v1691
      %v1693 = vsel %vm1684, %v1690, %v1692
      %v1694 = vsel %vm1686, %v1690, %v1693
      %1697 = vst [vmem:[#allocation10] sm:$0xff] %v1687
      %1698 = vst [vmem:[#allocation10 + $0x8] sm:$0xff] %v1694
    $region57: #{tpu_custom_call.1} parent=1 // pred_fallthru
      _
    %p1699 = scmp.gt.s32.totalorder 0, 0
    // Predicated region
    $region58: #{tpu_custom_call.1} parent=1 // pred_check
      %p1700 = pneg %p1699
    $region59: #{tpu_custom_call.1} parent=1 // pred_check_branch
      %1702 = sbr.rel (%p1700) target = $region61
    $region60: #{tpu_custom_call.1} parent=1 // pred_region
      %v1703 = vld [vmem:[#allocation10] sm:$0xff]
      %v1704 = vld [vmem:[#allocation10 + $0x8] sm:$0xff]
      %v1721 = vcombine.low %v1571, %v1572
      %v1722 = vcombine.low %v1573, %v1574
      %v1724 = vunpack.c.l.s4 1983009808
      %v1725 = vunpack.c.0.s8 %v1724
      %v1726 = vlaneseq
      %v1727 = vshrl.u32 %v1726, 7
      %v1728 = vsub.s32 %v1725, %v1727
      %v1729 = vrot.slane %v1721, %v1728
      %v1731 = vunpack.c.l.s4 1983009808
      %v1732 = vunpack.c.0.s8 %v1731
      %v1733 = vlaneseq
      %v1734 = vshrl.u32 %v1733, 7
      %v1735 = vsub.s32 %v1732, %v1734
      %v1736 = vrot.slane %v1722, %v1735
      %v1737 = vcombine.low %v1729, %v1736
      %v1738 = vcombine.low %v1575, %v1576
      %v1739 = vcombine.low %v1577, %v1578
      %v1741 = vunpack.c.l.s4 1983009808
      %v1742 = vunpack.c.0.s8 %v1741
      %v1743 = vlaneseq
      %v1744 = vshrl.u32 %v1743, 7
      %v1745 = vsub.s32 %v1742, %v1744
      %v1746 = vrot.slane %v1738, %v1745
      %v1748 = vunpack.c.l.s4 1983009808
      %v1749 = vunpack.c.0.s8 %v1748
      %v1750 = vlaneseq
      %v1751 = vshrl.u32 %v1750, 7
      %v1752 = vsub.s32 %v1749, %v1751
      %v1753 = vrot.slane %v1739, %v1752
      %v1754 = vcombine.low %v1746, %v1753
      %v1755 = vcombine.low %v1579, %v1580
      %v1756 = vcombine.low %v1581, %v1582
      %v1758 = vunpack.c.l.s4 1983009808
      %v1759 = vunpack.c.0.s8 %v1758
      %v1760 = vlaneseq
      %v1761 = vshrl.u32 %v1760, 7
      %v1762 = vsub.s32 %v1759, %v1761
      %v1763 = vrot.slane %v1755, %v1762
      %v1765 = vunpack.c.l.s4 1983009808
      %v1766 = vunpack.c.0.s8 %v1765
      %v1767 = vlaneseq
      %v1768 = vshrl.u32 %v1767, 7
      %v1769 = vsub.s32 %v1766, %v1768
      %v1770 = vrot.slane %v1756, %v1769
      %v1771 = vcombine.low %v1763, %v1770
      %v1772 = vcombine.low %v1583, %v1584
      %v1773 = vcombine.low %v1585, %v1586
      %v1775 = vunpack.c.l.s4 1983009808
      %v1776 = vunpack.c.0.s8 %v1775
      %v1777 = vlaneseq
      %v1778 = vshrl.u32 %v1777, 7
      %v1779 = vsub.s32 %v1776, %v1778
      %v1780 = vrot.slane %v1772, %v1779
      %v1782 = vunpack.c.l.s4 1983009808
      %v1783 = vunpack.c.0.s8 %v1782
      %v1784 = vlaneseq
      %v1785 = vshrl.u32 %v1784, 7
      %v1786 = vsub.s32 %v1783, %v1785
      %v1787 = vrot.slane %v1773, %v1786
      %v1788 = vcombine.low %v1780, %v1787
      %vm1789 = vcmask 1044484
      %v1790 = vsel %vm1789, %v1737, %v1737
      %vm1791 = vcmask 1046534
      %v1792 = vsel %vm1791, %v1737, %v1790
      %v1793 = vrot.slane %v1771, 7
      %vm1794 = vcmask 1041409
      %v1795 = vsel %vm1794, %v1793, %v1792
      %vm1796 = vcmask 1043459
      %v1797 = vsel %vm1796, %v1793, %v1795
      %vm1798 = vcmask 1045509
      %v1799 = vsel %vm1798, %v1793, %v1797
      %vm1800 = vcmask 1047559
      %v1801 = vsel %vm1800, %v1793, %v1799
      %v1802 = vsel %vm1789, %v1754, %v1754
      %v1803 = vsel %vm1791, %v1754, %v1802
      %v1804 = vrot.slane %v1788, 7
      %v1805 = vsel %vm1794, %v1804, %v1803
      %v1806 = vsel %vm1796, %v1804, %v1805
      %v1807 = vsel %vm1798, %v1804, %v1806
      %v1808 = vsel %vm1800, %v1804, %v1807
      %v1811 = vmax.f32 %v1703, %v1801
      %v1812 = vmax.f32 %v1704, %v1808
      %1813 = vst [vmem:[#allocation10] sm:$0xff] %v1811
      %1814 = vst [vmem:[#allocation10 + $0x8] sm:$0xff] %v1812
    $region61: #{tpu_custom_call.1} parent=1 // pred_fallthru
      _
    // Predicated region
    $region62: #{tpu_custom_call.1} parent=1 // pred_check
      _
    $region63: #{tpu_custom_call.1} parent=1 // pred_check_branch
      %1816 = sbr.rel (0) target = $region65
    $region64: #{tpu_custom_call.1} parent=1 // pred_region
      %s1818 = ssub.s32 256, 256
      %1819 = vsyncadd [#allocation4], %s1818
      %s1821 = sshll.u32 [#allocation10], 4
      %s1822 = int_to_ptr.vmem [resolvable:$true] %s1821
      %1824 = dma.vmem_to_hbm [thread:$0]  %s1822, 256, %s9, [#allocation4]
    $region65: #{tpu_custom_call.1} parent=1 // pred_fallthru
      _
    // Predicated region
    $region66: #{tpu_custom_call.1} parent=1 // pred_check
      _
    $region67: #{tpu_custom_call.1} parent=1 // pred_check_branch
      %1826 = sbr.rel (0) target = $region69
    $region68: #{tpu_custom_call.1} parent=1 // pred_region
      %1827 = dma.done [#allocation4], 256
    $region69: #{tpu_custom_call.1} parent=1 // pred_fallthru
      _
    %1828 = vsyncpa [#allocation3], 1
    %1829 = vsyncpa [#allocation6], 1
    %1830 = vsyncpa [#allocation9], 1
    %1831 = vsyncpa [#allocation4], 1

</llo_original>
